<compile_context>
chip_gen: v5e
topology: v5e:2x2
jax: 0.10.0
libtpu: 0.0.40
codegen_flags: <defaults>
</compile_context>

<pallas_src>
import math
from functools import partial

import numpy as np
import jax
import jax.numpy as jnp
from jax import lax
from jax.experimental import pallas as pl
from jax.experimental.pallas import tpu as pltpu


def _mha_flash_kernel(x_q_ref, x_kv_ref, wq_ref, bq_ref, wkv_ref, bkv_ref,
                      wo_ref, bo_ref, o_ref, q_scr, m_scr, l_scr, acc_scr,
                      *, num_heads: int):
    tq = x_q_ref.shape[1]
    tkv = x_kv_ref.shape[1]
    H = x_q_ref.shape[2]
    head_size = H // num_heads

    qi = pl.program_id(1)
    ki = pl.program_id(2)
    nkv = pl.num_programs(2)

    q_start = qi * tq
    q_last = q_start + (tq - 1)
    kv_start = ki * tkv
    kv_last = kv_start + (tkv - 1)

    @pl.when(ki == 0)
    def _init():
        # Q projection for this q block (scale already folded into wq / bq).
        q = (jnp.dot(x_q_ref[0], wq_ref[...], preferred_element_type=jnp.float32)
             + bq_ref[...])
        q_scr[...] = q.astype(q_scr.dtype)
        m_scr[...] = jnp.full_like(m_scr, -jnp.inf)
        l_scr[...] = jnp.zeros_like(l_scr)
        acc_scr[...] = jnp.zeros_like(acc_scr)

    def attend(apply_mask: bool):
        # K/V projection for this kv block (K columns first, then V).
        kv = (jnp.dot(x_kv_ref[0], wkv_ref[...], preferred_element_type=jnp.float32)
              + bkv_ref[...])
        k_mat = kv[:, :H].astype(q_scr.dtype)
        v_mat = kv[:, H:].astype(q_scr.dtype)
        if apply_mask:
            q_ids = q_start + lax.broadcasted_iota(jnp.int32, (tq, tkv), 0)
            k_ids = kv_start + lax.broadcasted_iota(jnp.int32, (tq, tkv), 1)
            mask = k_ids <= q_ids
        q_all = q_scr[...]
        for h in range(num_heads):         # static & small; slices of a lane-dense slab
            lo, hi = h * head_size, (h + 1) * head_size
            # Q . K^T without materializing a transpose.
            s = lax.dot_general(q_all[:, lo:hi], k_mat[:, lo:hi],
                                (((1,), (1,)), ((), ())),
                                preferred_element_type=jnp.float32)
            if apply_mask:
                s = jnp.where(mask, s, -jnp.inf)
            m_prev = m_scr[h]
            m_new = jnp.maximum(m_prev, jnp.max(s, axis=-1, keepdims=True))
            alpha = jnp.exp(m_prev - m_new)
            p = jnp.exp(s - m_new)
            l_scr[h] = alpha * l_scr[h] + jnp.sum(p, axis=-1, keepdims=True)
            acc_scr[:, lo:hi] = alpha * acc_scr[:, lo:hi] + jnp.dot(
                p.astype(v_mat.dtype), v_mat[:, lo:hi],
                preferred_element_type=jnp.float32)
            m_scr[h] = m_new

    # Causal classification of this (q block, kv block) pair.
    @pl.when(kv_last <= q_start)                 # fully visible: no masking work
    def _full_block():
        attend(apply_mask=False)

    @pl.when(jnp.logical_and(kv_start <= q_last, kv_last > q_start))   # diagonal
    def _diag_block():
        attend(apply_mask=True)
    # kv blocks with kv_start > q_last are fully masked -> no compute at all.

    @pl.when(ki == nkv - 1)
    def _finalize():
        for h in range(num_heads):
            lo, hi = h * head_size, (h + 1) * head_size
            inv_l = pl.reciprocal(l_scr[h], approx=True)   # EUP slot, ~2^-12 rel err
            acc_scr[:, lo:hi] = acc_scr[:, lo:hi] * inv_l
        attn = acc_scr[...].astype(wo_ref.dtype)           # lane-dense (tq, H) slab
        o_ref[0] = (jnp.dot(attn, wo_ref[...], preferred_element_type=jnp.float32)
                    + bo_ref[...]).astype(o_ref.dtype)


def multihead_masked_attention_forward(x, W_QKV, b_QKV, W_O, b_O, num_heads,
                                       *, q_block=256, kv_block=512,
                                       compute_dtype=None):
    """x: (B, S, H); W_QKV: (3H, H); b_QKV: (3H,); W_O: (H, H); b_O: (H,).

    Tile guidance: q_block<=256 / kv_block<=512 (v7x 64 MiB VMEM), multiples of
    256 on v6e/v7x, 128 granularity on v5e. compute_dtype=jnp.bfloat16 uses the
    bf16 MXU path (f32 accumulation); None keeps the input dtype.
    """
    B, S, H = x.shape
    assert H % num_heads == 0
    head_size = H // num_heads
    out_dtype = x.dtype
    cdt = np.dtype(compute_dtype) if compute_dtype is not None else np.dtype(x.dtype)

    # Fold the 1/sqrt(head_size) score scale into the Q projection (free).
    scale = 1.0 / np.sqrt(head_size)
    wq_t = (W_QKV[:H, :].T * scale).astype(cdt)            # (H, H)
    bq = (b_QKV[:H] * scale).astype(jnp.float32).reshape(1, H)
    wkv_t = W_QKV[H:, :].T.astype(cdt)                     # (H, 2H): K then V
    bkv = b_QKV[H:].astype(jnp.float32).reshape(1, 2 * H)
    wo_t = W_O.T.astype(cdt)                               # (H, H)
    bo = b_O.astype(jnp.float32).reshape(1, H)

    # Tile the (zero-padded) sequence; padded rows are sliced off at the end.
    def _round_up(a, m):
        return (a + m - 1) // m * m
    s8 = _round_up(S, 8)
    tq = min(q_block, s8)
    tkv = min(kv_block, s8)
    lcm = tq * tkv // math.gcd(tq, tkv)
    s_pad = _round_up(s8, lcm)
    nq, nkv = s_pad // tq, s_pad // tkv

    x_p = x.astype(cdt)
    if s_pad != S:
        x_p = jnp.pad(x_p, ((0, 0), (0, s_pad - S), (0, 0)))
    # TODO(synk): if H (or head_size) is not a multiple of 128 in deployment,
    # pad the head dimension too so every matmul operand is lane-dense.

    # Explicit VMEM budget: double-buffered activation tiles, single-buffered
    # weights, scratch, and score/prob temporaries; clamped to stay v7x-safe.
    isz = cdt.itemsize
    est = (2 * (tq + tkv) * H * isz                      # pipelined x_q / x_kv tiles
           + 2 * tq * H * np.dtype(out_dtype).itemsize   # pipelined out tile
           + 4 * H * H * isz + 16 * H                    # resident weights + biases
           + tq * H * isz + tq * H * 4                   # Q scratch + acc slab
           + 2 * num_heads * tq * 128 * 4                # m / l scratch (lane padded)
           + 3 * tq * tkv * 4)                           # score / prob temporaries
    vmem_limit = int(min(64 * 2 ** 20, max(32 * 2 ** 20, 2 * est)))

    kernel = partial(_mha_flash_kernel, num_heads=num_heads)
    # Whole-array VMEM residency: constant operands are not double-buffered.
    weight_spec = pl.BlockSpec(memory_space=pltpu.MemorySpace.VMEM)

    out = pl.pallas_call(
        kernel,
        out_shape=jax.ShapeDtypeStruct((B, s_pad, H), out_dtype),
        grid=(B, nq, nkv),
        in_specs=[
            pl.BlockSpec((1, tq, H), lambda b, qi, ki: (b, qi, 0)),    # x rows for Q
            pl.BlockSpec((1, tkv, H), lambda b, qi, ki: (b, ki, 0)),   # x rows for K/V
            weight_spec,   # W_Q^T (pre-scaled)
            weight_spec,   # b_Q  (pre-scaled)
            weight_spec,   # W_KV^T
            weight_spec,   # b_KV
            weight_spec,   # W_O^T
            weight_spec,   # b_O
        ],
        out_specs=pl.BlockSpec((1, tq, H), lambda b, qi, ki: (b, qi, 0)),
        scratch_shapes=[
            pltpu.VMEM((tq, H), cdt),                      # Q tile (compute dtype)
            pltpu.VMEM((num_heads, tq, 1), jnp.float32),   # running max per head
            pltpu.VMEM((num_heads, tq, 1), jnp.float32),   # running sum per head
            pltpu.VMEM((tq, H), jnp.float32),              # output accumulator slab
        ],
        compiler_params=pltpu.CompilerParams(
            dimension_semantics=("parallel", "parallel", "arbitrary"),
            vmem_limit_bytes=vmem_limit),
    )(x_p, x_p, wq_t, bq, wkv_t, bkv, wo_t, bo)
    return out[:, :S, :]


def reference_forward(x, W_QKV, b_QKV, W_O, b_O, num_heads):
    """Pure-JAX reference mirroring the PyTorch module."""
    B, S, H = x.shape
    hs = H // num_heads
    qkv = x @ W_QKV.T + b_QKV
    Q, K, V = qkv[..., :H], qkv[..., H:2 * H], qkv[..., 2 * H:]
    def split(t):
        return t.reshape(B, S, num_heads, hs).transpose(0, 2, 1, 3)  # (B, nh, S, hs)
    Qh, Kh, Vh = split(Q), split(K), split(V)
    scores = jnp.einsum('bhqd,bhkd->bhqk', Qh, Kh)
    mask = jnp.arange(S)[None, :] <= jnp.arange(S)[:, None]
    scores = jnp.where(mask, scores, -jnp.inf)
    probs = jax.nn.softmax(scores / np.sqrt(hs), axis=-1)
    out = jnp.einsum('bhqk,bhkd->bqhd', probs, Vh).reshape(B, S, H)
    return out @ W_O.T + b_O


if __name__ == "__main__":
    hidden_size = 32
    num_heads = 4
    B, S = 2, 8

    key = jax.random.PRNGKey(0)
    k1, k2, k3, k4, k5 = jax.random.split(key, 5)
    bound = 1.0 / np.sqrt(hidden_size)
    # nn.Linear(hidden, 3*hidden): weight (3H, H), bias (3H,)
    W_QKV = jax.random.uniform(k1, (3 * hidden_size, hidden_size), jnp.float32, -bound, bound)
    b_QKV = jax.random.uniform(k2, (3 * hidden_size,), jnp.float32, -bound, bound)
    # nn.Linear(hidden, hidden): weight (H, H), bias (H,)
    W_O = jax.random.uniform(k3, (hidden_size, hidden_size), jnp.float32, -bound, bound)
    b_O = jax.random.uniform(k4, (hidden_size,), jnp.float32, -bound, bound)

    x = jax.random.normal(k5, (B, S, hidden_size), jnp.float32)

    ref = reference_forward(x, W_QKV, b_QKV, W_O, b_O, num_heads)

    # f32 compute path (tolerance covers the approx EUP reciprocal, ~2^-12 rel err).
    out = multihead_masked_attention_forward(x, W_QKV, b_QKV, W_O, b_O, num_heads)
    out = jax.block_until_ready(out)
    assert out.shape == (B, S, hidden_size)
    err32 = np.max(np.abs(np.asarray(out) - np.asarray(ref)))
    assert np.allclose(np.asarray(out), np.asarray(ref), atol=2e-3, rtol=2e-3), \
        f"f32 max abs err {err32}"

    # bf16 compute path (v6e/v7x MXU-friendly, f32 accumulation) with looser tolerance.
    out_bf16 = multihead_masked_attention_forward(
        x, W_QKV, b_QKV, W_O, b_O, num_heads, compute_dtype=jnp.bfloat16)
    out_bf16 = jax.block_until_ready(out_bf16)
    err16 = np.max(np.abs(np.asarray(out_bf16) - np.asarray(ref)))
    assert np.allclose(np.asarray(out_bf16), np.asarray(ref), atol=5e-2, rtol=5e-2), \
        f"bf16 max abs err {err16}"

    print("KERNEL_OK")
</pallas_src>

<mosaic_0001>
module attributes {stable_mosaic.version = 11 : i64} {
  func.func @_mha_flash_kernel(%arg0: i32, %arg1: i32, %arg2: i32, %arg3: memref<1x8x32xf32, #tpu.memory_space<vmem>>, %arg4: memref<1x8x32xf32, #tpu.memory_space<vmem>>, %arg5: memref<32x32xf32, #tpu.memory_space<vmem>>, %arg6: memref<1x32xf32, #tpu.memory_space<vmem>>, %arg7: memref<32x64xf32, #tpu.memory_space<vmem>>, %arg8: memref<1x64xf32, #tpu.memory_space<vmem>>, %arg9: memref<32x32xf32, #tpu.memory_space<vmem>>, %arg10: memref<1x32xf32, #tpu.memory_space<vmem>>, %arg11: memref<1x8x32xf32, #tpu.memory_space<vmem>>, %arg12: memref<8x32xf32, #tpu.memory_space<vmem>>, %arg13: memref<4x8x1xf32, #tpu.memory_space<vmem>>, %arg14: memref<4x8x1xf32, #tpu.memory_space<vmem>>, %arg15: memref<8x32xf32, #tpu.memory_space<vmem>>) attributes {dimension_semantics = [#tpu.dimension_semantics<parallel>, #tpu.dimension_semantics<parallel>, #tpu.dimension_semantics<arbitrary>], iteration_bounds = array<i64: 2, 1, 1>, scalar_prefetch = 0 : i64, scratch_operands = 4 : i64, tpu.core_type = #tpu.core_type<tc>, window_params = [{transform_indices = @transform_0, window_bounds = array<i64: 1, 8, 32>}, {transform_indices = @transform_1, window_bounds = array<i64: 1, 8, 32>}, {pipeline_mode = #tpu.pipeline_mode<synchronous>, transform_indices = @transform_2, window_bounds = array<i64: 32, 32>}, {pipeline_mode = #tpu.pipeline_mode<synchronous>, transform_indices = @transform_3, window_bounds = array<i64: 1, 32>}, {pipeline_mode = #tpu.pipeline_mode<synchronous>, transform_indices = @transform_4, window_bounds = array<i64: 32, 64>}, {pipeline_mode = #tpu.pipeline_mode<synchronous>, transform_indices = @transform_5, window_bounds = array<i64: 1, 64>}, {pipeline_mode = #tpu.pipeline_mode<synchronous>, transform_indices = @transform_6, window_bounds = array<i64: 32, 32>}, {pipeline_mode = #tpu.pipeline_mode<synchronous>, transform_indices = @transform_7, window_bounds = array<i64: 1, 32>}, {transform_indices = @transform_8, window_bounds = array<i64: 1, 8, 32>}]} {
    %c8_i32 = arith.constant 8 : i32
    %0 = arith.muli %arg1, %c8_i32 : i32
    %c7_i32 = arith.constant 7 : i32
    %1 = arith.addi %0, %c7_i32 : i32
    %c8_i32_0 = arith.constant 8 : i32
    %2 = arith.muli %arg2, %c8_i32_0 : i32
    %c7_i32_1 = arith.constant 7 : i32
    %3 = arith.addi %2, %c7_i32_1 : i32
    %c0_i32 = arith.constant 0 : i32
    %4 = arith.cmpi eq, %arg2, %c0_i32 : i32
    %5 = arith.extui %4 : i1 to i32
    %c0_i32_2 = arith.constant 0 : i32
    %6 = arith.cmpi ne, %5, %c0_i32_2 : i32
    scf.if %6 {
      %c0 = arith.constant 0 : index
      %c0_7 = arith.constant 0 : index
      %c0_8 = arith.constant 0 : index
      %18 = vector.load %arg3[%c0, %c0_7, %c0_8] : memref<1x8x32xf32, #tpu.memory_space<vmem>>, vector<1x8x32xf32>
      %19 = vector.shape_cast %18 : vector<1x8x32xf32> to vector<8x32xf32>
      %c0_9 = arith.constant 0 : index
      %c0_10 = arith.constant 0 : index
      %20 = vector.load %arg5[%c0_9, %c0_10] : memref<32x32xf32, #tpu.memory_space<vmem>>, vector<32x32xf32>
      %cst = arith.constant dense<0.000000e+00> : vector<8x32xf32>
      %21 = tpu.matmul %19, %20, %cst {dimension_numbers = #tpu.dot_dimension_numbers<[1], [0], [0], [1], [0, 0, 1, 1], [], []>} : vector<8x32xf32>, vector<32x32xf32>, vector<8x32xf32> -> vector<8x32xf32>
      %c0_11 = arith.constant 0 : index
      %c0_12 = arith.constant 0 : index
      %22 = vector.load %arg6[%c0_11, %c0_12] : memref<1x32xf32, #tpu.memory_space<vmem>>, vector<1x32xf32>
      %23 = vector.broadcast %22 : vector<1x32xf32> to vector<8x32xf32>
      %24 = arith.addf %21, %23 : vector<8x32xf32>
      %c0_13 = arith.constant 0 : index
      %c0_14 = arith.constant 0 : index
      %25 = vector.load %arg12[%c0_13, %c0_14] : memref<8x32xf32, #tpu.memory_space<vmem>>, vector<8x32xf32>
      tpu.vector_store %arg12[%c0_13, %c0_14], %24 {strides = array<i32>} : memref<8x32xf32, #tpu.memory_space<vmem>>, vector<8x32xf32>,
      %cst_15 = arith.constant 0xFF800000 : f32
      %26 = vector.broadcast %cst_15 : f32 to vector<4x8x1xf32>
      %c0_16 = arith.constant 0 : index
      %c0_17 = arith.constant 0 : index
      %c0_18 = arith.constant 0 : index
      %27 = vector.load %arg13[%c0_16, %c0_17, %c0_18] : memref<4x8x1xf32, #tpu.memory_space<vmem>>, vector<4x8x1xf32>
      tpu.vector_store %arg13[%c0_16, %c0_17, %c0_18], %26 {strides = array<i32>} : memref<4x8x1xf32, #tpu.memory_space<vmem>>, vector<4x8x1xf32>,
      %cst_19 = arith.constant 0.000000e+00 : f32
      %28 = vector.broadcast %cst_19 : f32 to vector<4x8x1xf32>
      %c0_20 = arith.constant 0 : index
      %c0_21 = arith.constant 0 : index
      %c0_22 = arith.constant 0 : index
      %29 = vector.load %arg14[%c0_20, %c0_21, %c0_22] : memref<4x8x1xf32, #tpu.memory_space<vmem>>, vector<4x8x1xf32>
      tpu.vector_store %arg14[%c0_20, %c0_21, %c0_22], %28 {strides = array<i32>} : memref<4x8x1xf32, #tpu.memory_space<vmem>>, vector<4x8x1xf32>,
      %cst_23 = arith.constant 0.000000e+00 : f32
      %30 = vector.broadcast %cst_23 : f32 to vector<8x32xf32>
      %c0_24 = arith.constant 0 : index
      %c0_25 = arith.constant 0 : index
      %31 = vector.load %arg15[%c0_24, %c0_25] : memref<8x32xf32, #tpu.memory_space<vmem>>, vector<8x32xf32>
      tpu.vector_store %arg15[%c0_24, %c0_25], %30 {strides = array<i32>} : memref<8x32xf32, #tpu.memory_space<vmem>>, vector<8x32xf32>,
    } else {
    }
    %7 = arith.cmpi sle, %3, %0 : i32
    %8 = arith.extui %7 : i1 to i32
    %c0_i32_3 = arith.constant 0 : i32
    %9 = arith.cmpi ne, %8, %c0_i32_3 : i32
    scf.if %9 {
      %c0 = arith.constant 0 : index
      %c0_7 = arith.constant 0 : index
      %c0_8 = arith.constant 0 : index
      %18 = vector.load %arg4[%c0, %c0_7, %c0_8] : memref<1x8x32xf32, #tpu.memory_space<vmem>>, vector<1x8x32xf32>
      %19 = vector.shape_cast %18 : vector<1x8x32xf32> to vector<8x32xf32>
      %c0_9 = arith.constant 0 : index
      %c0_10 = arith.constant 0 : index
      %20 = vector.load %arg7[%c0_9, %c0_10] : memref<32x64xf32, #tpu.memory_space<vmem>>, vector<32x64xf32>
      %cst = arith.constant dense<0.000000e+00> : vector<8x64xf32>
      %21 = tpu.matmul %19, %20, %cst {dimension_numbers = #tpu.dot_dimension_numbers<[1], [0], [0], [1], [0, 0, 1, 1], [], []>} : vector<8x32xf32>, vector<32x64xf32>, vector<8x64xf32> -> vector<8x64xf32>
      %c0_11 = arith.constant 0 : index
      %c0_12 = arith.constant 0 : index
      %22 = vector.load %arg8[%c0_11, %c0_12] : memref<1x64xf32, #tpu.memory_space<vmem>>, vector<1x64xf32>
      %23 = vector.broadcast %22 : vector<1x64xf32> to vector<8x64xf32>
      %24 = arith.addf %21, %23 : vector<8x64xf32>
      %25 = vector.extract_strided_slice %24 {offsets = [0, 0], sizes = [8, 32], strides = [1, 1]} : vector<8x64xf32> to vector<8x32xf32>
      %26 = vector.extract_strided_slice %24 {offsets = [0, 32], sizes = [8, 32], strides = [1, 1]} : vector<8x64xf32> to vector<8x32xf32>
      %c0_13 = arith.constant 0 : index
      %c0_14 = arith.constant 0 : index
      %27 = vector.load %arg12[%c0_13, %c0_14] : memref<8x32xf32, #tpu.memory_space<vmem>>, vector<8x32xf32>
      %28 = vector.extract_strided_slice %27 {offsets = [0, 0], sizes = [8, 8], strides = [1, 1]} : vector<8x32xf32> to vector<8x8xf32>
      %29 = vector.extract_strided_slice %25 {offsets = [0, 0], sizes = [8, 8], strides = [1, 1]} : vector<8x32xf32> to vector<8x8xf32>
      %cst_15 = arith.constant dense<0.000000e+00> : vector<8x8xf32>
      %30 = tpu.matmul %28, %29, %cst_15 {dimension_numbers = #tpu.dot_dimension_numbers<[1], [1], [0], [0], [0, 0, 1, 0], [], []>} : vector<8x8xf32>, vector<8x8xf32>, vector<8x8xf32> -> vector<8x8xf32>
      %c0_16 = arith.constant 0 : index
      %c0_17 = arith.constant 0 : index
      %c0_18 = arith.constant 0 : index
      %31 = vector.load %arg13[%c0_16, %c0_17, %c0_18] : memref<4x8x1xf32, #tpu.memory_space<vmem>>, vector<1x8x1xf32>
      %32 = vector.shape_cast %31 : vector<1x8x1xf32> to vector<8x1xf32>
      %cst_19 = arith.constant dense<0xFF800000> : vector<8xf32>
      %33 = vector.multi_reduction <maximumf>, %30, %cst_19 [1] : vector<8x8xf32> to vector<8xf32>
      %34 = vector.shape_cast %33 : vector<8xf32> to vector<8x1xf32>
      %35 = arith.maximumf %32, %34 : vector<8x1xf32>
      %36 = arith.subf %32, %35 : vector<8x1xf32>
      %37 = math.exp %36 : vector<8x1xf32>
      %38 = vector.broadcast %35 : vector<8x1xf32> to vector<8x8xf32>
      %39 = arith.subf %30, %38 : vector<8x8xf32>
      %40 = math.exp %39 : vector<8x8xf32>
      %c0_20 = arith.constant 0 : index
      %c0_21 = arith.constant 0 : index
      %c0_22 = arith.constant 0 : index
      %41 = vector.load %arg14[%c0_20, %c0_21, %c0_22] : memref<4x8x1xf32, #tpu.memory_space<vmem>>, vector<1x8x1xf32>
      %42 = vector.shape_cast %41 : vector<1x8x1xf32> to vector<8x1xf32>
      %43 = arith.mulf %37, %42 : vector<8x1xf32>
      %cst_23 = arith.constant dense<0.000000e+00> : vector<8xf32>
      %44 = vector.multi_reduction <add>, %40, %cst_23 [1] : vector<8x8xf32> to vector<8xf32>
      %45 = vector.shape_cast %44 : vector<8xf32> to vector<8x1xf32>
      %46 = arith.addf %43, %45 : vector<8x1xf32>
      %c0_24 = arith.constant 0 : index
      %c0_25 = arith.constant 0 : index
      %c0_26 = arith.constant 0 : index
      %47 = vector.load %arg14[%c0_24, %c0_25, %c0_26] : memref<4x8x1xf32, #tpu.memory_space<vmem>>, vector<1x8x1xf32>
      %48 = vector.shape_cast %47 : vector<1x8x1xf32> to vector<8x1xf32>
      %49 = vector.shape_cast %46 : vector<8x1xf32> to vector<1x8x1xf32>
      tpu.vector_store %arg14[%c0_24, %c0_25, %c0_26], %49 {strides = array<i32>} : memref<4x8x1xf32, #tpu.memory_space<vmem>>, vector<1x8x1xf32>,
      %c0_27 = arith.constant 0 : index
      %c0_28 = arith.constant 0 : index
      %50 = vector.load %arg15[%c0_27, %c0_28] : memref<8x32xf32, #tpu.memory_space<vmem>>, vector<8x8xf32>
      %51 = vector.broadcast %37 : vector<8x1xf32> to vector<8x8xf32>
      %52 = arith.mulf %51, %50 : vector<8x8xf32>
      %53 = vector.extract_strided_slice %26 {offsets = [0, 0], sizes = [8, 8], strides = [1, 1]} : vector<8x32xf32> to vector<8x8xf32>
      %cst_29 = arith.constant dense<0.000000e+00> : vector<8x8xf32>
      %54 = tpu.matmul %40, %53, %cst_29 {dimension_numbers = #tpu.dot_dimension_numbers<[1], [0], [0], [1], [0, 0, 1, 1], [], []>} : vector<8x8xf32>, vector<8x8xf32>, vector<8x8xf32> -> vector<8x8xf32>
      %55 = arith.addf %52, %54 : vector<8x8xf32>
      %c0_30 = arith.constant 0 : index
      %c0_31 = arith.constant 0 : index
      %56 = vector.load %arg15[%c0_30, %c0_31] : memref<8x32xf32, #tpu.memory_space<vmem>>, vector<8x8xf32>
      tpu.vector_store %arg15[%c0_30, %c0_31], %55 {strides = array<i32>} : memref<8x32xf32, #tpu.memory_space<vmem>>, vector<8x8xf32>,
      %c0_32 = arith.constant 0 : index
      %c0_33 = arith.constant 0 : index
      %c0_34 = arith.constant 0 : index
      %57 = vector.load %arg13[%c0_32, %c0_33, %c0_34] : memref<4x8x1xf32, #tpu.memory_space<vmem>>, vector<1x8x1xf32>
      %58 = vector.shape_cast %57 : vector<1x8x1xf32> to vector<8x1xf32>
      %59 = vector.shape_cast %35 : vector<8x1xf32> to vector<1x8x1xf32>
      tpu.vector_store %arg13[%c0_32, %c0_33, %c0_34], %59 {strides = array<i32>} : memref<4x8x1xf32, #tpu.memory_space<vmem>>, vector<1x8x1xf32>,
      %60 = vector.extract_strided_slice %27 {offsets = [0, 8], sizes = [8, 8], strides = [1, 1]} : vector<8x32xf32> to vector<8x8xf32>
      %61 = vector.extract_strided_slice %25 {offsets = [0, 8], sizes = [8, 8], strides = [1, 1]} : vector<8x32xf32> to vector<8x8xf32>
      %cst_35 = arith.constant dense<0.000000e+00> : vector<8x8xf32>
      %62 = tpu.matmul %60, %61, %cst_35 {dimension_numbers = #tpu.dot_dimension_numbers<[1], [1], [0], [0], [0, 0, 1, 0], [], []>} : vector<8x8xf32>, vector<8x8xf32>, vector<8x8xf32> -> vector<8x8xf32>
      %c1 = arith.constant 1 : index
      %c0_36 = arith.constant 0 : index
      %c0_37 = arith.constant 0 : index
      %63 = vector.load %arg13[%c1, %c0_36, %c0_37] : memref<4x8x1xf32, #tpu.memory_space<vmem>>, vector<1x8x1xf32>
      %64 = vector.shape_cast %63 : vector<1x8x1xf32> to vector<8x1xf32>
      %cst_38 = arith.constant dense<0xFF800000> : vector<8xf32>
      %65 = vector.multi_reduction <maximumf>, %62, %cst_38 [1] : vector<8x8xf32> to vector<8xf32>
      %66 = vector.shape_cast %65 : vector<8xf32> to vector<8x1xf32>
      %67 = arith.maximumf %64, %66 : vector<8x1xf32>
      %68 = arith.subf %64, %67 : vector<8x1xf32>
      %69 = math.exp %68 : vector<8x1xf32>
      %70 = vector.broadcast %67 : vector<8x1xf32> to vector<8x8xf32>
      %71 = arith.subf %62, %70 : vector<8x8xf32>
      %72 = math.exp %71 : vector<8x8xf32>
      %c1_39 = arith.constant 1 : index
      %c0_40 = arith.constant 0 : index
      %c0_41 = arith.constant 0 : index
      %73 = vector.load %arg14[%c1_39, %c0_40, %c0_41] : memref<4x8x1xf32, #tpu.memory_space<vmem>>, vector<1x8x1xf32>
      %74 = vector.shape_cast %73 : vector<1x8x1xf32> to vector<8x1xf32>
      %75 = arith.mulf %69, %74 : vector<8x1xf32>
      %cst_42 = arith.constant dense<0.000000e+00> : vector<8xf32>
      %76 = vector.multi_reduction <add>, %72, %cst_42 [1] : vector<8x8xf32> to vector<8xf32>
      %77 = vector.shape_cast %76 : vector<8xf32> to vector<8x1xf32>
      %78 = arith.addf %75, %77 : vector<8x1xf32>
      %c1_43 = arith.constant 1 : index
      %c0_44 = arith.constant 0 : index
      %c0_45 = arith.constant 0 : index
      %79 = vector.load %arg14[%c1_43, %c0_44, %c0_45] : memref<4x8x1xf32, #tpu.memory_space<vmem>>, vector<1x8x1xf32>
      %80 = vector.shape_cast %79 : vector<1x8x1xf32> to vector<8x1xf32>
      %81 = vector.shape_cast %78 : vector<8x1xf32> to vector<1x8x1xf32>
      tpu.vector_store %arg14[%c1_43, %c0_44, %c0_45], %81 {strides = array<i32>} : memref<4x8x1xf32, #tpu.memory_space<vmem>>, vector<1x8x1xf32>,
      %c0_46 = arith.constant 0 : index
      %c8 = arith.constant 8 : index
      %82 = vector.load %arg15[%c0_46, %c8] : memref<8x32xf32, #tpu.memory_space<vmem>>, vector<8x8xf32>
      %83 = vector.broadcast %69 : vector<8x1xf32> to vector<8x8xf32>
      %84 = arith.mulf %83, %82 : vector<8x8xf32>
      %85 = vector.extract_strided_slice %26 {offsets = [0, 8], sizes = [8, 8], strides = [1, 1]} : vector<8x32xf32> to vector<8x8xf32>
      %cst_47 = arith.constant dense<0.000000e+00> : vector<8x8xf32>
      %86 = tpu.matmul %72, %85, %cst_47 {dimension_numbers = #tpu.dot_dimension_numbers<[1], [0], [0], [1], [0, 0, 1, 1], [], []>} : vector<8x8xf32>, vector<8x8xf32>, vector<8x8xf32> -> vector<8x8xf32>
      %87 = arith.addf %84, %86 : vector<8x8xf32>
      %c0_48 = arith.constant 0 : index
      %c8_49 = arith.constant 8 : index
      %88 = vector.load %arg15[%c0_48, %c8_49] : memref<8x32xf32, #tpu.memory_space<vmem>>, vector<8x8xf32>
      tpu.vector_store %arg15[%c0_48, %c8_49], %87 {strides = array<i32>} : memref<8x32xf32, #tpu.memory_space<vmem>>, vector<8x8xf32>,
      %c1_50 = arith.constant 1 : index
      %c0_51 = arith.constant 0 : index
      %c0_52 = arith.constant 0 : index
      %89 = vector.load %arg13[%c1_50, %c0_51, %c0_52] : memref<4x8x1xf32, #tpu.memory_space<vmem>>, vector<1x8x1xf32>
      %90 = vector.shape_cast %89 : vector<1x8x1xf32> to vector<8x1xf32>
      %91 = vector.shape_cast %67 : vector<8x1xf32> to vector<1x8x1xf32>
      tpu.vector_store %arg13[%c1_50, %c0_51, %c0_52], %91 {strides = array<i32>} : memref<4x8x1xf32, #tpu.memory_space<vmem>>, vector<1x8x1xf32>,
      %92 = vector.extract_strided_slice %27 {offsets = [0, 16], sizes = [8, 8], strides = [1, 1]} : vector<8x32xf32> to vector<8x8xf32>
      %93 = vector.extract_strided_slice %25 {offsets = [0, 16], sizes = [8, 8], strides = [1, 1]} : vector<8x32xf32> to vector<8x8xf32>
      %cst_53 = arith.constant dense<0.000000e+00> : vector<8x8xf32>
      %94 = tpu.matmul %92, %93, %cst_53 {dimension_numbers = #tpu.dot_dimension_numbers<[1], [1], [0], [0], [0, 0, 1, 0], [], []>} : vector<8x8xf32>, vector<8x8xf32>, vector<8x8xf32> -> vector<8x8xf32>
      %c2 = arith.constant 2 : index
      %c0_54 = arith.constant 0 : index
      %c0_55 = arith.constant 0 : index
      %95 = vector.load %arg13[%c2, %c0_54, %c0_55] : memref<4x8x1xf32, #tpu.memory_space<vmem>>, vector<1x8x1xf32>
      %96 = vector.shape_cast %95 : vector<1x8x1xf32> to vector<8x1xf32>
      %cst_56 = arith.constant dense<0xFF800000> : vector<8xf32>
      %97 = vector.multi_reduction <maximumf>, %94, %cst_56 [1] : vector<8x8xf32> to vector<8xf32>
      %98 = vector.shape_cast %97 : vector<8xf32> to vector<8x1xf32>
      %99 = arith.maximumf %96, %98 : vector<8x1xf32>
      %100 = arith.subf %96, %99 : vector<8x1xf32>
      %101 = math.exp %100 : vector<8x1xf32>
      %102 = vector.broadcast %99 : vector<8x1xf32> to vector<8x8xf32>
      %103 = arith.subf %94, %102 : vector<8x8xf32>
      %104 = math.exp %103 : vector<8x8xf32>
      %c2_57 = arith.constant 2 : index
      %c0_58 = arith.constant 0 : index
      %c0_59 = arith.constant 0 : index
      %105 = vector.load %arg14[%c2_57, %c0_58, %c0_59] : memref<4x8x1xf32, #tpu.memory_space<vmem>>, vector<1x8x1xf32>
      %106 = vector.shape_cast %105 : vector<1x8x1xf32> to vector<8x1xf32>
      %107 = arith.mulf %101, %106 : vector<8x1xf32>
      %cst_60 = arith.constant dense<0.000000e+00> : vector<8xf32>
      %108 = vector.multi_reduction <add>, %104, %cst_60 [1] : vector<8x8xf32> to vector<8xf32>
      %109 = vector.shape_cast %108 : vector<8xf32> to vector<8x1xf32>
      %110 = arith.addf %107, %109 : vector<8x1xf32>
      %c2_61 = arith.constant 2 : index
      %c0_62 = arith.constant 0 : index
      %c0_63 = arith.constant 0 : index
      %111 = vector.load %arg14[%c2_61, %c0_62, %c0_63] : memref<4x8x1xf32, #tpu.memory_space<vmem>>, vector<1x8x1xf32>
      %112 = vector.shape_cast %111 : vector<1x8x1xf32> to vector<8x1xf32>
      %113 = vector.shape_cast %110 : vector<8x1xf32> to vector<1x8x1xf32>
      tpu.vector_store %arg14[%c2_61, %c0_62, %c0_63], %113 {strides = array<i32>} : memref<4x8x1xf32, #tpu.memory_space<vmem>>, vector<1x8x1xf32>,
      %c0_64 = arith.constant 0 : index
      %c16 = arith.constant 16 : index
      %114 = vector.load %arg15[%c0_64, %c16] : memref<8x32xf32, #tpu.memory_space<vmem>>, vector<8x8xf32>
      %115 = vector.broadcast %101 : vector<8x1xf32> to vector<8x8xf32>
      %116 = arith.mulf %115, %114 : vector<8x8xf32>
      %117 = vector.extract_strided_slice %26 {offsets = [0, 16], sizes = [8, 8], strides = [1, 1]} : vector<8x32xf32> to vector<8x8xf32>
      %cst_65 = arith.constant dense<0.000000e+00> : vector<8x8xf32>
      %118 = tpu.matmul %104, %117, %cst_65 {dimension_numbers = #tpu.dot_dimension_numbers<[1], [0], [0], [1], [0, 0, 1, 1], [], []>} : vector<8x8xf32>, vector<8x8xf32>, vector<8x8xf32> -> vector<8x8xf32>
      %119 = arith.addf %116, %118 : vector<8x8xf32>
      %c0_66 = arith.constant 0 : index
      %c16_67 = arith.constant 16 : index
      %120 = vector.load %arg15[%c0_66, %c16_67] : memref<8x32xf32, #tpu.memory_space<vmem>>, vector<8x8xf32>
      tpu.vector_store %arg15[%c0_66, %c16_67], %119 {strides = array<i32>} : memref<8x32xf32, #tpu.memory_space<vmem>>, vector<8x8xf32>,
      %c2_68 = arith.constant 2 : index
      %c0_69 = arith.constant 0 : index
      %c0_70 = arith.constant 0 : index
      %121 = vector.load %arg13[%c2_68, %c0_69, %c0_70] : memref<4x8x1xf32, #tpu.memory_space<vmem>>, vector<1x8x1xf32>
      %122 = vector.shape_cast %121 : vector<1x8x1xf32> to vector<8x1xf32>
      %123 = vector.shape_cast %99 : vector<8x1xf32> to vector<1x8x1xf32>
      tpu.vector_store %arg13[%c2_68, %c0_69, %c0_70], %123 {strides = array<i32>} : memref<4x8x1xf32, #tpu.memory_space<vmem>>, vector<1x8x1xf32>,
      %124 = vector.extract_strided_slice %27 {offsets = [0, 24], sizes = [8, 8], strides = [1, 1]} : vector<8x32xf32> to vector<8x8xf32>
      %125 = vector.extract_strided_slice %25 {offsets = [0, 24], sizes = [8, 8], strides = [1, 1]} : vector<8x32xf32> to vector<8x8xf32>
      %cst_71 = arith.constant dense<0.000000e+00> : vector<8x8xf32>
      %126 = tpu.matmul %124, %125, %cst_71 {dimension_numbers = #tpu.dot_dimension_numbers<[1], [1], [0], [0], [0, 0, 1, 0], [], []>} : vector<8x8xf32>, vector<8x8xf32>, vector<8x8xf32> -> vector<8x8xf32>
      %c3 = arith.constant 3 : index
      %c0_72 = arith.constant 0 : index
      %c0_73 = arith.constant 0 : index
      %127 = vector.load %arg13[%c3, %c0_72, %c0_73] : memref<4x8x1xf32, #tpu.memory_space<vmem>>, vector<1x8x1xf32>
      %128 = vector.shape_cast %127 : vector<1x8x1xf32> to vector<8x1xf32>
      %cst_74 = arith.constant dense<0xFF800000> : vector<8xf32>
      %129 = vector.multi_reduction <maximumf>, %126, %cst_74 [1] : vector<8x8xf32> to vector<8xf32>
      %130 = vector.shape_cast %129 : vector<8xf32> to vector<8x1xf32>
      %131 = arith.maximumf %128, %130 : vector<8x1xf32>
      %132 = arith.subf %128, %131 : vector<8x1xf32>
      %133 = math.exp %132 : vector<8x1xf32>
      %134 = vector.broadcast %131 : vector<8x1xf32> to vector<8x8xf32>
      %135 = arith.subf %126, %134 : vector<8x8xf32>
      %136 = math.exp %135 : vector<8x8xf32>
      %c3_75 = arith.constant 3 : index
      %c0_76 = arith.constant 0 : index
      %c0_77 = arith.constant 0 : index
      %137 = vector.load %arg14[%c3_75, %c0_76, %c0_77] : memref<4x8x1xf32, #tpu.memory_space<vmem>>, vector<1x8x1xf32>
      %138 = vector.shape_cast %137 : vector<1x8x1xf32> to vector<8x1xf32>
      %139 = arith.mulf %133, %138 : vector<8x1xf32>
      %cst_78 = arith.constant dense<0.000000e+00> : vector<8xf32>
      %140 = vector.multi_reduction <add>, %136, %cst_78 [1] : vector<8x8xf32> to vector<8xf32>
      %141 = vector.shape_cast %140 : vector<8xf32> to vector<8x1xf32>
      %142 = arith.addf %139, %141 : vector<8x1xf32>
      %c3_79 = arith.constant 3 : index
      %c0_80 = arith.constant 0 : index
      %c0_81 = arith.constant 0 : index
      %143 = vector.load %arg14[%c3_79, %c0_80, %c0_81] : memref<4x8x1xf32, #tpu.memory_space<vmem>>, vector<1x8x1xf32>
      %144 = vector.shape_cast %143 : vector<1x8x1xf32> to vector<8x1xf32>
      %145 = vector.shape_cast %142 : vector<8x1xf32> to vector<1x8x1xf32>
      tpu.vector_store %arg14[%c3_79, %c0_80, %c0_81], %145 {strides = array<i32>} : memref<4x8x1xf32, #tpu.memory_space<vmem>>, vector<1x8x1xf32>,
      %c0_82 = arith.constant 0 : index
      %c24 = arith.constant 24 : index
      %146 = vector.load %arg15[%c0_82, %c24] : memref<8x32xf32, #tpu.memory_space<vmem>>, vector<8x8xf32>
      %147 = vector.broadcast %133 : vector<8x1xf32> to vector<8x8xf32>
      %148 = arith.mulf %147, %146 : vector<8x8xf32>
      %149 = vector.extract_strided_slice %26 {offsets = [0, 24], sizes = [8, 8], strides = [1, 1]} : vector<8x32xf32> to vector<8x8xf32>
      %cst_83 = arith.constant dense<0.000000e+00> : vector<8x8xf32>
      %150 = tpu.matmul %136, %149, %cst_83 {dimension_numbers = #tpu.dot_dimension_numbers<[1], [0], [0], [1], [0, 0, 1, 1], [], []>} : vector<8x8xf32>, vector<8x8xf32>, vector<8x8xf32> -> vector<8x8xf32>
      %151 = arith.addf %148, %150 : vector<8x8xf32>
      %c0_84 = arith.constant 0 : index
      %c24_85 = arith.constant 24 : index
      %152 = vector.load %arg15[%c0_84, %c24_85] : memref<8x32xf32, #tpu.memory_space<vmem>>, vector<8x8xf32>
      tpu.vector_store %arg15[%c0_84, %c24_85], %151 {strides = array<i32>} : memref<8x32xf32, #tpu.memory_space<vmem>>, vector<8x8xf32>,
      %c3_86 = arith.constant 3 : index
      %c0_87 = arith.constant 0 : index
      %c0_88 = arith.constant 0 : index
      %153 = vector.load %arg13[%c3_86, %c0_87, %c0_88] : memref<4x8x1xf32, #tpu.memory_space<vmem>>, vector<1x8x1xf32>
      %154 = vector.shape_cast %153 : vector<1x8x1xf32> to vector<8x1xf32>
      %155 = vector.shape_cast %131 : vector<8x1xf32> to vector<1x8x1xf32>
      tpu.vector_store %arg13[%c3_86, %c0_87, %c0_88], %155 {strides = array<i32>} : memref<4x8x1xf32, #tpu.memory_space<vmem>>, vector<1x8x1xf32>,
    } else {
    }
    %10 = arith.cmpi sle, %2, %1 : i32
    %11 = arith.cmpi sgt, %3, %0 : i32
    %12 = arith.andi %10, %11 : i1
    %13 = arith.extui %12 : i1 to i32
    %c0_i32_4 = arith.constant 0 : i32
    %14 = arith.cmpi ne, %13, %c0_i32_4 : i32
    scf.if %14 {
      %c0 = arith.constant 0 : index
      %c0_7 = arith.constant 0 : index
      %c0_8 = arith.constant 0 : index
      %18 = vector.load %arg4[%c0, %c0_7, %c0_8] : memref<1x8x32xf32, #tpu.memory_space<vmem>>, vector<1x8x32xf32>
      %19 = vector.shape_cast %18 : vector<1x8x32xf32> to vector<8x32xf32>
      %c0_9 = arith.constant 0 : index
      %c0_10 = arith.constant 0 : index
      %20 = vector.load %arg7[%c0_9, %c0_10] : memref<32x64xf32, #tpu.memory_space<vmem>>, vector<32x64xf32>
      %cst = arith.constant dense<0.000000e+00> : vector<8x64xf32>
      %21 = tpu.matmul %19, %20, %cst {dimension_numbers = #tpu.dot_dimension_numbers<[1], [0], [0], [1], [0, 0, 1, 1], [], []>} : vector<8x32xf32>, vector<32x64xf32>, vector<8x64xf32> -> vector<8x64xf32>
      %c0_11 = arith.constant 0 : index
      %c0_12 = arith.constant 0 : index
      %22 = vector.load %arg8[%c0_11, %c0_12] : memref<1x64xf32, #tpu.memory_space<vmem>>, vector<1x64xf32>
      %23 = vector.broadcast %22 : vector<1x64xf32> to vector<8x64xf32>
      %24 = arith.addf %21, %23 : vector<8x64xf32>
      %25 = vector.extract_strided_slice %24 {offsets = [0, 0], sizes = [8, 32], strides = [1, 1]} : vector<8x64xf32> to vector<8x32xf32>
      %26 = vector.extract_strided_slice %24 {offsets = [0, 32], sizes = [8, 32], strides = [1, 1]} : vector<8x64xf32> to vector<8x32xf32>
      %27 = tpu.iota {dimensions = array<i32: 0>} : vector<8x8xi32>
      %28 = vector.broadcast %0 : i32 to vector<8x8xi32>
      %29 = arith.addi %28, %27 : vector<8x8xi32>
      %30 = tpu.iota {dimensions = array<i32: 1>} : vector<8x8xi32>
      %31 = vector.broadcast %2 : i32 to vector<8x8xi32>
      %32 = arith.addi %31, %30 : vector<8x8xi32>
      %33 = arith.cmpi sle, %32, %29 : vector<8x8xi32>
      %c0_13 = arith.constant 0 : index
      %c0_14 = arith.constant 0 : index
      %34 = vector.load %arg12[%c0_13, %c0_14] : memref<8x32xf32, #tpu.memory_space<vmem>>, vector<8x32xf32>
      %35 = vector.extract_strided_slice %34 {offsets = [0, 0], sizes = [8, 8], strides = [1, 1]} : vector<8x32xf32> to vector<8x8xf32>
      %36 = vector.extract_strided_slice %25 {offsets = [0, 0], sizes = [8, 8], strides = [1, 1]} : vector<8x32xf32> to vector<8x8xf32>
      %cst_15 = arith.constant dense<0.000000e+00> : vector<8x8xf32>
      %37 = tpu.matmul %35, %36, %cst_15 {dimension_numbers = #tpu.dot_dimension_numbers<[1], [1], [0], [0], [0, 0, 1, 0], [], []>} : vector<8x8xf32>, vector<8x8xf32>, vector<8x8xf32> -> vector<8x8xf32>
      %cst_16 = arith.constant 0xFF800000 : f32
      %38 = vector.broadcast %cst_16 : f32 to vector<8x8xf32>
      %39 = arith.select %33, %37, %38 : vector<8x8xi1>, vector<8x8xf32>
      %c0_17 = arith.constant 0 : index
      %c0_18 = arith.constant 0 : index
      %c0_19 = arith.constant 0 : index
      %40 = vector.load %arg13[%c0_17, %c0_18, %c0_19] : memref<4x8x1xf32, #tpu.memory_space<vmem>>, vector<1x8x1xf32>
      %41 = vector.shape_cast %40 : vector<1x8x1xf32> to vector<8x1xf32>
      %cst_20 = arith.constant dense<0xFF800000> : vector<8xf32>
      %42 = vector.multi_reduction <maximumf>, %39, %cst_20 [1] : vector<8x8xf32> to vector<8xf32>
      %43 = vector.shape_cast %42 : vector<8xf32> to vector<8x1xf32>
      %44 = arith.maximumf %41, %43 : vector<8x1xf32>
      %45 = arith.subf %41, %44 : vector<8x1xf32>
      %46 = math.exp %45 : vector<8x1xf32>
      %47 = vector.broadcast %44 : vector<8x1xf32> to vector<8x8xf32>
      %48 = arith.subf %39, %47 : vector<8x8xf32>
      %49 = math.exp %48 : vector<8x8xf32>
      %c0_21 = arith.constant 0 : index
      %c0_22 = arith.constant 0 : index
      %c0_23 = arith.constant 0 : index
      %50 = vector.load %arg14[%c0_21, %c0_22, %c0_23] : memref<4x8x1xf32, #tpu.memory_space<vmem>>, vector<1x8x1xf32>
      %51 = vector.shape_cast %50 : vector<1x8x1xf32> to vector<8x1xf32>
      %52 = arith.mulf %46, %51 : vector<8x1xf32>
      %cst_24 = arith.constant dense<0.000000e+00> : vector<8xf32>
      %53 = vector.multi_reduction <add>, %49, %cst_24 [1] : vector<8x8xf32> to vector<8xf32>
      %54 = vector.shape_cast %53 : vector<8xf32> to vector<8x1xf32>
      %55 = arith.addf %52, %54 : vector<8x1xf32>
      %c0_25 = arith.constant 0 : index
      %c0_26 = arith.constant 0 : index
      %c0_27 = arith.constant 0 : index
      %56 = vector.load %arg14[%c0_25, %c0_26, %c0_27] : memref<4x8x1xf32, #tpu.memory_space<vmem>>, vector<1x8x1xf32>
      %57 = vector.shape_cast %56 : vector<1x8x1xf32> to vector<8x1xf32>
      %58 = vector.shape_cast %55 : vector<8x1xf32> to vector<1x8x1xf32>
      tpu.vector_store %arg14[%c0_25, %c0_26, %c0_27], %58 {strides = array<i32>} : memref<4x8x1xf32, #tpu.memory_space<vmem>>, vector<1x8x1xf32>,
      %c0_28 = arith.constant 0 : index
      %c0_29 = arith.constant 0 : index
      %59 = vector.load %arg15[%c0_28, %c0_29] : memref<8x32xf32, #tpu.memory_space<vmem>>, vector<8x8xf32>
      %60 = vector.broadcast %46 : vector<8x1xf32> to vector<8x8xf32>
      %61 = arith.mulf %60, %59 : vector<8x8xf32>
      %62 = vector.extract_strided_slice %26 {offsets = [0, 0], sizes = [8, 8], strides = [1, 1]} : vector<8x32xf32> to vector<8x8xf32>
      %cst_30 = arith.constant dense<0.000000e+00> : vector<8x8xf32>
      %63 = tpu.matmul %49, %62, %cst_30 {dimension_numbers = #tpu.dot_dimension_numbers<[1], [0], [0], [1], [0, 0, 1, 1], [], []>} : vector<8x8xf32>, vector<8x8xf32>, vector<8x8xf32> -> vector<8x8xf32>
      %64 = arith.addf %61, %63 : vector<8x8xf32>
      %c0_31 = arith.constant 0 : index
      %c0_32 = arith.constant 0 : index
      %65 = vector.load %arg15[%c0_31, %c0_32] : memref<8x32xf32, #tpu.memory_space<vmem>>, vector<8x8xf32>
      tpu.vector_store %arg15[%c0_31, %c0_32], %64 {strides = array<i32>} : memref<8x32xf32, #tpu.memory_space<vmem>>, vector<8x8xf32>,
      %c0_33 = arith.constant 0 : index
      %c0_34 = arith.constant 0 : index
      %c0_35 = arith.constant 0 : index
      %66 = vector.load %arg13[%c0_33, %c0_34, %c0_35] : memref<4x8x1xf32, #tpu.memory_space<vmem>>, vector<1x8x1xf32>
      %67 = vector.shape_cast %66 : vector<1x8x1xf32> to vector<8x1xf32>
      %68 = vector.shape_cast %44 : vector<8x1xf32> to vector<1x8x1xf32>
      tpu.vector_store %arg13[%c0_33, %c0_34, %c0_35], %68 {strides = array<i32>} : memref<4x8x1xf32, #tpu.memory_space<vmem>>, vector<1x8x1xf32>,
      %69 = vector.extract_strided_slice %34 {offsets = [0, 8], sizes = [8, 8], strides = [1, 1]} : vector<8x32xf32> to vector<8x8xf32>
      %70 = vector.extract_strided_slice %25 {offsets = [0, 8], sizes = [8, 8], strides = [1, 1]} : vector<8x32xf32> to vector<8x8xf32>
      %cst_36 = arith.constant dense<0.000000e+00> : vector<8x8xf32>
      %71 = tpu.matmul %69, %70, %cst_36 {dimension_numbers = #tpu.dot_dimension_numbers<[1], [1], [0], [0], [0, 0, 1, 0], [], []>} : vector<8x8xf32>, vector<8x8xf32>, vector<8x8xf32> -> vector<8x8xf32>
      %cst_37 = arith.constant 0xFF800000 : f32
      %72 = vector.broadcast %cst_37 : f32 to vector<8x8xf32>
      %73 = arith.select %33, %71, %72 : vector<8x8xi1>, vector<8x8xf32>
      %c1 = arith.constant 1 : index
      %c0_38 = arith.constant 0 : index
      %c0_39 = arith.constant 0 : index
      %74 = vector.load %arg13[%c1, %c0_38, %c0_39] : memref<4x8x1xf32, #tpu.memory_space<vmem>>, vector<1x8x1xf32>
      %75 = vector.shape_cast %74 : vector<1x8x1xf32> to vector<8x1xf32>
      %cst_40 = arith.constant dense<0xFF800000> : vector<8xf32>
      %76 = vector.multi_reduction <maximumf>, %73, %cst_40 [1] : vector<8x8xf32> to vector<8xf32>
      %77 = vector.shape_cast %76 : vector<8xf32> to vector<8x1xf32>
      %78 = arith.maximumf %75, %77 : vector<8x1xf32>
      %79 = arith.subf %75, %78 : vector<8x1xf32>
      %80 = math.exp %79 : vector<8x1xf32>
      %81 = vector.broadcast %78 : vector<8x1xf32> to vector<8x8xf32>
      %82 = arith.subf %73, %81 : vector<8x8xf32>
      %83 = math.exp %82 : vector<8x8xf32>
      %c1_41 = arith.constant 1 : index
      %c0_42 = arith.constant 0 : index
      %c0_43 = arith.constant 0 : index
      %84 = vector.load %arg14[%c1_41, %c0_42, %c0_43] : memref<4x8x1xf32, #tpu.memory_space<vmem>>, vector<1x8x1xf32>
      %85 = vector.shape_cast %84 : vector<1x8x1xf32> to vector<8x1xf32>
      %86 = arith.mulf %80, %85 : vector<8x1xf32>
      %cst_44 = arith.constant dense<0.000000e+00> : vector<8xf32>
      %87 = vector.multi_reduction <add>, %83, %cst_44 [1] : vector<8x8xf32> to vector<8xf32>
      %88 = vector.shape_cast %87 : vector<8xf32> to vector<8x1xf32>
      %89 = arith.addf %86, %88 : vector<8x1xf32>
      %c1_45 = arith.constant 1 : index
      %c0_46 = arith.constant 0 : index
      %c0_47 = arith.constant 0 : index
      %90 = vector.load %arg14[%c1_45, %c0_46, %c0_47] : memref<4x8x1xf32, #tpu.memory_space<vmem>>, vector<1x8x1xf32>
      %91 = vector.shape_cast %90 : vector<1x8x1xf32> to vector<8x1xf32>
      %92 = vector.shape_cast %89 : vector<8x1xf32> to vector<1x8x1xf32>
      tpu.vector_store %arg14[%c1_45, %c0_46, %c0_47], %92 {strides = array<i32>} : memref<4x8x1xf32, #tpu.memory_space<vmem>>, vector<1x8x1xf32>,
      %c0_48 = arith.constant 0 : index
      %c8 = arith.constant 8 : index
      %93 = vector.load %arg15[%c0_48, %c8] : memref<8x32xf32, #tpu.memory_space<vmem>>, vector<8x8xf32>
      %94 = vector.broadcast %80 : vector<8x1xf32> to vector<8x8xf32>
      %95 = arith.mulf %94, %93 : vector<8x8xf32>
      %96 = vector.extract_strided_slice %26 {offsets = [0, 8], sizes = [8, 8], strides = [1, 1]} : vector<8x32xf32> to vector<8x8xf32>
      %cst_49 = arith.constant dense<0.000000e+00> : vector<8x8xf32>
      %97 = tpu.matmul %83, %96, %cst_49 {dimension_numbers = #tpu.dot_dimension_numbers<[1], [0], [0], [1], [0, 0, 1, 1], [], []>} : vector<8x8xf32>, vector<8x8xf32>, vector<8x8xf32> -> vector<8x8xf32>
      %98 = arith.addf %95, %97 : vector<8x8xf32>
      %c0_50 = arith.constant 0 : index
      %c8_51 = arith.constant 8 : index
      %99 = vector.load %arg15[%c0_50, %c8_51] : memref<8x32xf32, #tpu.memory_space<vmem>>, vector<8x8xf32>
      tpu.vector_store %arg15[%c0_50, %c8_51], %98 {strides = array<i32>} : memref<8x32xf32, #tpu.memory_space<vmem>>, vector<8x8xf32>,
      %c1_52 = arith.constant 1 : index
      %c0_53 = arith.constant 0 : index
      %c0_54 = arith.constant 0 : index
      %100 = vector.load %arg13[%c1_52, %c0_53, %c0_54] : memref<4x8x1xf32, #tpu.memory_space<vmem>>, vector<1x8x1xf32>
      %101 = vector.shape_cast %100 : vector<1x8x1xf32> to vector<8x1xf32>
      %102 = vector.shape_cast %78 : vector<8x1xf32> to vector<1x8x1xf32>
      tpu.vector_store %arg13[%c1_52, %c0_53, %c0_54], %102 {strides = array<i32>} : memref<4x8x1xf32, #tpu.memory_space<vmem>>, vector<1x8x1xf32>,
      %103 = vector.extract_strided_slice %34 {offsets = [0, 16], sizes = [8, 8], strides = [1, 1]} : vector<8x32xf32> to vector<8x8xf32>
      %104 = vector.extract_strided_slice %25 {offsets = [0, 16], sizes = [8, 8], strides = [1, 1]} : vector<8x32xf32> to vector<8x8xf32>
      %cst_55 = arith.constant dense<0.000000e+00> : vector<8x8xf32>
      %105 = tpu.matmul %103, %104, %cst_55 {dimension_numbers = #tpu.dot_dimension_numbers<[1], [1], [0], [0], [0, 0, 1, 0], [], []>} : vector<8x8xf32>, vector<8x8xf32>, vector<8x8xf32> -> vector<8x8xf32>
      %cst_56 = arith.constant 0xFF800000 : f32
      %106 = vector.broadcast %cst_56 : f32 to vector<8x8xf32>
      %107 = arith.select %33, %105, %106 : vector<8x8xi1>, vector<8x8xf32>
      %c2 = arith.constant 2 : index
      %c0_57 = arith.constant 0 : index
      %c0_58 = arith.constant 0 : index
      %108 = vector.load %arg13[%c2, %c0_57, %c0_58] : memref<4x8x1xf32, #tpu.memory_space<vmem>>, vector<1x8x1xf32>
      %109 = vector.shape_cast %108 : vector<1x8x1xf32> to vector<8x1xf32>
      %cst_59 = arith.constant dense<0xFF800000> : vector<8xf32>
      %110 = vector.multi_reduction <maximumf>, %107, %cst_59 [1] : vector<8x8xf32> to vector<8xf32>
      %111 = vector.shape_cast %110 : vector<8xf32> to vector<8x1xf32>
      %112 = arith.maximumf %109, %111 : vector<8x1xf32>
      %113 = arith.subf %109, %112 : vector<8x1xf32>
      %114 = math.exp %113 : vector<8x1xf32>
      %115 = vector.broadcast %112 : vector<8x1xf32> to vector<8x8xf32>
      %116 = arith.subf %107, %115 : vector<8x8xf32>
      %117 = math.exp %116 : vector<8x8xf32>
      %c2_60 = arith.constant 2 : index
      %c0_61 = arith.constant 0 : index
      %c0_62 = arith.constant 0 : index
      %118 = vector.load %arg14[%c2_60, %c0_61, %c0_62] : memref<4x8x1xf32, #tpu.memory_space<vmem>>, vector<1x8x1xf32>
      %119 = vector.shape_cast %118 : vector<1x8x1xf32> to vector<8x1xf32>
      %120 = arith.mulf %114, %119 : vector<8x1xf32>
      %cst_63 = arith.constant dense<0.000000e+00> : vector<8xf32>
      %121 = vector.multi_reduction <add>, %117, %cst_63 [1] : vector<8x8xf32> to vector<8xf32>
      %122 = vector.shape_cast %121 : vector<8xf32> to vector<8x1xf32>
      %123 = arith.addf %120, %122 : vector<8x1xf32>
      %c2_64 = arith.constant 2 : index
      %c0_65 = arith.constant 0 : index
      %c0_66 = arith.constant 0 : index
      %124 = vector.load %arg14[%c2_64, %c0_65, %c0_66] : memref<4x8x1xf32, #tpu.memory_space<vmem>>, vector<1x8x1xf32>
      %125 = vector.shape_cast %124 : vector<1x8x1xf32> to vector<8x1xf32>
      %126 = vector.shape_cast %123 : vector<8x1xf32> to vector<1x8x1xf32>
      tpu.vector_store %arg14[%c2_64, %c0_65, %c0_66], %126 {strides = array<i32>} : memref<4x8x1xf32, #tpu.memory_space<vmem>>, vector<1x8x1xf32>,
      %c0_67 = arith.constant 0 : index
      %c16 = arith.constant 16 : index
      %127 = vector.load %arg15[%c0_67, %c16] : memref<8x32xf32, #tpu.memory_space<vmem>>, vector<8x8xf32>
      %128 = vector.broadcast %114 : vector<8x1xf32> to vector<8x8xf32>
      %129 = arith.mulf %128, %127 : vector<8x8xf32>
      %130 = vector.extract_strided_slice %26 {offsets = [0, 16], sizes = [8, 8], strides = [1, 1]} : vector<8x32xf32> to vector<8x8xf32>
      %cst_68 = arith.constant dense<0.000000e+00> : vector<8x8xf32>
      %131 = tpu.matmul %117, %130, %cst_68 {dimension_numbers = #tpu.dot_dimension_numbers<[1], [0], [0], [1], [0, 0, 1, 1], [], []>} : vector<8x8xf32>, vector<8x8xf32>, vector<8x8xf32> -> vector<8x8xf32>
      %132 = arith.addf %129, %131 : vector<8x8xf32>
      %c0_69 = arith.constant 0 : index
      %c16_70 = arith.constant 16 : index
      %133 = vector.load %arg15[%c0_69, %c16_70] : memref<8x32xf32, #tpu.memory_space<vmem>>, vector<8x8xf32>
      tpu.vector_store %arg15[%c0_69, %c16_70], %132 {strides = array<i32>} : memref<8x32xf32, #tpu.memory_space<vmem>>, vector<8x8xf32>,
      %c2_71 = arith.constant 2 : index
      %c0_72 = arith.constant 0 : index
      %c0_73 = arith.constant 0 : index
      %134 = vector.load %arg13[%c2_71, %c0_72, %c0_73] : memref<4x8x1xf32, #tpu.memory_space<vmem>>, vector<1x8x1xf32>
      %135 = vector.shape_cast %134 : vector<1x8x1xf32> to vector<8x1xf32>
      %136 = vector.shape_cast %112 : vector<8x1xf32> to vector<1x8x1xf32>
      tpu.vector_store %arg13[%c2_71, %c0_72, %c0_73], %136 {strides = array<i32>} : memref<4x8x1xf32, #tpu.memory_space<vmem>>, vector<1x8x1xf32>,
      %137 = vector.extract_strided_slice %34 {offsets = [0, 24], sizes = [8, 8], strides = [1, 1]} : vector<8x32xf32> to vector<8x8xf32>
      %138 = vector.extract_strided_slice %25 {offsets = [0, 24], sizes = [8, 8], strides = [1, 1]} : vector<8x32xf32> to vector<8x8xf32>
      %cst_74 = arith.constant dense<0.000000e+00> : vector<8x8xf32>
      %139 = tpu.matmul %137, %138, %cst_74 {dimension_numbers = #tpu.dot_dimension_numbers<[1], [1], [0], [0], [0, 0, 1, 0], [], []>} : vector<8x8xf32>, vector<8x8xf32>, vector<8x8xf32> -> vector<8x8xf32>
      %cst_75 = arith.constant 0xFF800000 : f32
      %140 = vector.broadcast %cst_75 : f32 to vector<8x8xf32>
      %141 = arith.select %33, %139, %140 : vector<8x8xi1>, vector<8x8xf32>
      %c3 = arith.constant 3 : index
      %c0_76 = arith.constant 0 : index
      %c0_77 = arith.constant 0 : index
      %142 = vector.load %arg13[%c3, %c0_76, %c0_77] : memref<4x8x1xf32, #tpu.memory_space<vmem>>, vector<1x8x1xf32>
      %143 = vector.shape_cast %142 : vector<1x8x1xf32> to vector<8x1xf32>
      %cst_78 = arith.constant dense<0xFF800000> : vector<8xf32>
      %144 = vector.multi_reduction <maximumf>, %141, %cst_78 [1] : vector<8x8xf32> to vector<8xf32>
      %145 = vector.shape_cast %144 : vector<8xf32> to vector<8x1xf32>
      %146 = arith.maximumf %143, %145 : vector<8x1xf32>
      %147 = arith.subf %143, %146 : vector<8x1xf32>
      %148 = math.exp %147 : vector<8x1xf32>
      %149 = vector.broadcast %146 : vector<8x1xf32> to vector<8x8xf32>
      %150 = arith.subf %141, %149 : vector<8x8xf32>
      %151 = math.exp %150 : vector<8x8xf32>
      %c3_79 = arith.constant 3 : index
      %c0_80 = arith.constant 0 : index
      %c0_81 = arith.constant 0 : index
      %152 = vector.load %arg14[%c3_79, %c0_80, %c0_81] : memref<4x8x1xf32, #tpu.memory_space<vmem>>, vector<1x8x1xf32>
      %153 = vector.shape_cast %152 : vector<1x8x1xf32> to vector<8x1xf32>
      %154 = arith.mulf %148, %153 : vector<8x1xf32>
      %cst_82 = arith.constant dense<0.000000e+00> : vector<8xf32>
      %155 = vector.multi_reduction <add>, %151, %cst_82 [1] : vector<8x8xf32> to vector<8xf32>
      %156 = vector.shape_cast %155 : vector<8xf32> to vector<8x1xf32>
      %157 = arith.addf %154, %156 : vector<8x1xf32>
      %c3_83 = arith.constant 3 : index
      %c0_84 = arith.constant 0 : index
      %c0_85 = arith.constant 0 : index
      %158 = vector.load %arg14[%c3_83, %c0_84, %c0_85] : memref<4x8x1xf32, #tpu.memory_space<vmem>>, vector<1x8x1xf32>
      %159 = vector.shape_cast %158 : vector<1x8x1xf32> to vector<8x1xf32>
      %160 = vector.shape_cast %157 : vector<8x1xf32> to vector<1x8x1xf32>
      tpu.vector_store %arg14[%c3_83, %c0_84, %c0_85], %160 {strides = array<i32>} : memref<4x8x1xf32, #tpu.memory_space<vmem>>, vector<1x8x1xf32>,
      %c0_86 = arith.constant 0 : index
      %c24 = arith.constant 24 : index
      %161 = vector.load %arg15[%c0_86, %c24] : memref<8x32xf32, #tpu.memory_space<vmem>>, vector<8x8xf32>
      %162 = vector.broadcast %148 : vector<8x1xf32> to vector<8x8xf32>
      %163 = arith.mulf %162, %161 : vector<8x8xf32>
      %164 = vector.extract_strided_slice %26 {offsets = [0, 24], sizes = [8, 8], strides = [1, 1]} : vector<8x32xf32> to vector<8x8xf32>
      %cst_87 = arith.constant dense<0.000000e+00> : vector<8x8xf32>
      %165 = tpu.matmul %151, %164, %cst_87 {dimension_numbers = #tpu.dot_dimension_numbers<[1], [0], [0], [1], [0, 0, 1, 1], [], []>} : vector<8x8xf32>, vector<8x8xf32>, vector<8x8xf32> -> vector<8x8xf32>
      %166 = arith.addf %163, %165 : vector<8x8xf32>
      %c0_88 = arith.constant 0 : index
      %c24_89 = arith.constant 24 : index
      %167 = vector.load %arg15[%c0_88, %c24_89] : memref<8x32xf32, #tpu.memory_space<vmem>>, vector<8x8xf32>
      tpu.vector_store %arg15[%c0_88, %c24_89], %166 {strides = array<i32>} : memref<8x32xf32, #tpu.memory_space<vmem>>, vector<8x8xf32>,
      %c3_90 = arith.constant 3 : index
      %c0_91 = arith.constant 0 : index
      %c0_92 = arith.constant 0 : index
      %168 = vector.load %arg13[%c3_90, %c0_91, %c0_92] : memref<4x8x1xf32, #tpu.memory_space<vmem>>, vector<1x8x1xf32>
      %169 = vector.shape_cast %168 : vector<1x8x1xf32> to vector<8x1xf32>
      %170 = vector.shape_cast %146 : vector<8x1xf32> to vector<1x8x1xf32>
      tpu.vector_store %arg13[%c3_90, %c0_91, %c0_92], %170 {strides = array<i32>} : memref<4x8x1xf32, #tpu.memory_space<vmem>>, vector<1x8x1xf32>,
    } else {
    }
    %c0_i32_5 = arith.constant 0 : i32
    %15 = arith.cmpi eq, %arg2, %c0_i32_5 : i32
    %16 = arith.extui %15 : i1 to i32
    %c0_i32_6 = arith.constant 0 : i32
    %17 = arith.cmpi ne, %16, %c0_i32_6 : i32
    scf.if %17 {
      %c0 = arith.constant 0 : index
      %c0_7 = arith.constant 0 : index
      %c0_8 = arith.constant 0 : index
      %18 = vector.load %arg14[%c0, %c0_7, %c0_8] : memref<4x8x1xf32, #tpu.memory_space<vmem>>, vector<1x8x1xf32>
      %19 = vector.shape_cast %18 : vector<1x8x1xf32> to vector<8x1xf32>
      %20 = tpu.reciprocal %19 {approx = true} : vector<8x1xf32> -> vector<8x1xf32>
      %c0_9 = arith.constant 0 : index
      %c0_10 = arith.constant 0 : index
      %21 = vector.load %arg15[%c0_9, %c0_10] : memref<8x32xf32, #tpu.memory_space<vmem>>, vector<8x8xf32>
      %22 = vector.broadcast %20 : vector<8x1xf32> to vector<8x8xf32>
      %23 = arith.mulf %21, %22 : vector<8x8xf32>
      %c0_11 = arith.constant 0 : index
      %c0_12 = arith.constant 0 : index
      %24 = vector.load %arg15[%c0_11, %c0_12] : memref<8x32xf32, #tpu.memory_space<vmem>>, vector<8x8xf32>
      tpu.vector_store %arg15[%c0_11, %c0_12], %23 {strides = array<i32>} : memref<8x32xf32, #tpu.memory_space<vmem>>, vector<8x8xf32>,
      %c1 = arith.constant 1 : index
      %c0_13 = arith.constant 0 : index
      %c0_14 = arith.constant 0 : index
      %25 = vector.load %arg14[%c1, %c0_13, %c0_14] : memref<4x8x1xf32, #tpu.memory_space<vmem>>, vector<1x8x1xf32>
      %26 = vector.shape_cast %25 : vector<1x8x1xf32> to vector<8x1xf32>
      %27 = tpu.reciprocal %26 {approx = true} : vector<8x1xf32> -> vector<8x1xf32>
      %c0_15 = arith.constant 0 : index
      %c8 = arith.constant 8 : index
      %28 = vector.load %arg15[%c0_15, %c8] : memref<8x32xf32, #tpu.memory_space<vmem>>, vector<8x8xf32>
      %29 = vector.broadcast %27 : vector<8x1xf32> to vector<8x8xf32>
      %30 = arith.mulf %28, %29 : vector<8x8xf32>
      %c0_16 = arith.constant 0 : index
      %c8_17 = arith.constant 8 : index
      %31 = vector.load %arg15[%c0_16, %c8_17] : memref<8x32xf32, #tpu.memory_space<vmem>>, vector<8x8xf32>
      tpu.vector_store %arg15[%c0_16, %c8_17], %30 {strides = array<i32>} : memref<8x32xf32, #tpu.memory_space<vmem>>, vector<8x8xf32>,
      %c2 = arith.constant 2 : index
      %c0_18 = arith.constant 0 : index
      %c0_19 = arith.constant 0 : index
      %32 = vector.load %arg14[%c2, %c0_18, %c0_19] : memref<4x8x1xf32, #tpu.memory_space<vmem>>, vector<1x8x1xf32>
      %33 = vector.shape_cast %32 : vector<1x8x1xf32> to vector<8x1xf32>
      %34 = tpu.reciprocal %33 {approx = true} : vector<8x1xf32> -> vector<8x1xf32>
      %c0_20 = arith.constant 0 : index
      %c16 = arith.constant 16 : index
      %35 = vector.load %arg15[%c0_20, %c16] : memref<8x32xf32, #tpu.memory_space<vmem>>, vector<8x8xf32>
      %36 = vector.broadcast %34 : vector<8x1xf32> to vector<8x8xf32>
      %37 = arith.mulf %35, %36 : vector<8x8xf32>
      %c0_21 = arith.constant 0 : index
      %c16_22 = arith.constant 16 : index
      %38 = vector.load %arg15[%c0_21, %c16_22] : memref<8x32xf32, #tpu.memory_space<vmem>>, vector<8x8xf32>
      tpu.vector_store %arg15[%c0_21, %c16_22], %37 {strides = array<i32>} : memref<8x32xf32, #tpu.memory_space<vmem>>, vector<8x8xf32>,
      %c3 = arith.constant 3 : index
      %c0_23 = arith.constant 0 : index
      %c0_24 = arith.constant 0 : index
      %39 = vector.load %arg14[%c3, %c0_23, %c0_24] : memref<4x8x1xf32, #tpu.memory_space<vmem>>, vector<1x8x1xf32>
      %40 = vector.shape_cast %39 : vector<1x8x1xf32> to vector<8x1xf32>
      %41 = tpu.reciprocal %40 {approx = true} : vector<8x1xf32> -> vector<8x1xf32>
      %c0_25 = arith.constant 0 : index
      %c24 = arith.constant 24 : index
      %42 = vector.load %arg15[%c0_25, %c24] : memref<8x32xf32, #tpu.memory_space<vmem>>, vector<8x8xf32>
      %43 = vector.broadcast %41 : vector<8x1xf32> to vector<8x8xf32>
      %44 = arith.mulf %42, %43 : vector<8x8xf32>
      %c0_26 = arith.constant 0 : index
      %c24_27 = arith.constant 24 : index
      %45 = vector.load %arg15[%c0_26, %c24_27] : memref<8x32xf32, #tpu.memory_space<vmem>>, vector<8x8xf32>
      tpu.vector_store %arg15[%c0_26, %c24_27], %44 {strides = array<i32>} : memref<8x32xf32, #tpu.memory_space<vmem>>, vector<8x8xf32>,
      %c0_28 = arith.constant 0 : index
      %c0_29 = arith.constant 0 : index
      %46 = vector.load %arg15[%c0_28, %c0_29] : memref<8x32xf32, #tpu.memory_space<vmem>>, vector<8x32xf32>
      %c0_30 = arith.constant 0 : index
      %c0_31 = arith.constant 0 : index
      %47 = vector.load %arg9[%c0_30, %c0_31] : memref<32x32xf32, #tpu.memory_space<vmem>>, vector<32x32xf32>
      %cst = arith.constant dense<0.000000e+00> : vector<8x32xf32>
      %48 = tpu.matmul %46, %47, %cst {dimension_numbers = #tpu.dot_dimension_numbers<[1], [0], [0], [1], [0, 0, 1, 1], [], []>} : vector<8x32xf32>, vector<32x32xf32>, vector<8x32xf32> -> vector<8x32xf32>
      %c0_32 = arith.constant 0 : index
      %c0_33 = arith.constant 0 : index
      %49 = vector.load %arg10[%c0_32, %c0_33] : memref<1x32xf32, #tpu.memory_space<vmem>>, vector<1x32xf32>
      %50 = vector.broadcast %49 : vector<1x32xf32> to vector<8x32xf32>
      %51 = arith.addf %48, %50 : vector<8x32xf32>
      %c0_34 = arith.constant 0 : index
      %c0_35 = arith.constant 0 : index
      %c0_36 = arith.constant 0 : index
      %52 = vector.load %arg11[%c0_34, %c0_35, %c0_36] : memref<1x8x32xf32, #tpu.memory_space<vmem>>, vector<1x8x32xf32>
      %53 = vector.shape_cast %52 : vector<1x8x32xf32> to vector<8x32xf32>
      %54 = vector.shape_cast %51 : vector<8x32xf32> to vector<1x8x32xf32>
      tpu.vector_store %arg11[%c0_34, %c0_35, %c0_36], %54 {strides = array<i32>} : memref<1x8x32xf32, #tpu.memory_space<vmem>>, vector<1x8x32xf32>,
    } else {
    }
    return
  }
  func.func @transform_0(%arg0: i32, %arg1: i32, %arg2: i32) -> (i32, i32, i32) {
    %c0_i32 = arith.constant 0 : i32
    %c0_i32_0 = arith.constant 0 : i32
    return %arg0, %arg1, %c0_i32 : i32, i32, i32
  }
  func.func @transform_1(%arg0: i32, %arg1: i32, %arg2: i32) -> (i32, i32, i32) {
    %c0_i32 = arith.constant 0 : i32
    %c0_i32_0 = arith.constant 0 : i32
    return %arg0, %arg2, %c0_i32 : i32, i32, i32
  }
  func.func @transform_2(%arg0: i32, %arg1: i32, %arg2: i32) -> (i32, i32) {
    %c0_i32 = arith.constant 0 : i32
    %c0_i32_0 = arith.constant 0 : i32
    %c0_i32_1 = arith.constant 0 : i32
    return %c0_i32, %c0_i32_0 : i32, i32
  }
  func.func @transform_3(%arg0: i32, %arg1: i32, %arg2: i32) -> (i32, i32) {
    %c0_i32 = arith.constant 0 : i32
    %c0_i32_0 = arith.constant 0 : i32
    %c0_i32_1 = arith.constant 0 : i32
    return %c0_i32, %c0_i32_0 : i32, i32
  }
  func.func @transform_4(%arg0: i32, %arg1: i32, %arg2: i32) -> (i32, i32) {
    %c0_i32 = arith.constant 0 : i32
    %c0_i32_0 = arith.constant 0 : i32
    %c0_i32_1 = arith.constant 0 : i32
    return %c0_i32, %c0_i32_0 : i32, i32
  }
  func.func @transform_5(%arg0: i32, %arg1: i32, %arg2: i32) -> (i32, i32) {
    %c0_i32 = arith.constant 0 : i32
    %c0_i32_0 = arith.constant 0 : i32
    %c0_i32_1 = arith.constant 0 : i32
    return %c0_i32, %c0_i32_0 : i32, i32
  }
  func.func @transform_6(%arg0: i32, %arg1: i32, %arg2: i32) -> (i32, i32) {
    %c0_i32 = arith.constant 0 : i32
    %c0_i32_0 = arith.constant 0 : i32
    %c0_i32_1 = arith.constant 0 : i32
    return %c0_i32, %c0_i32_0 : i32, i32
  }
  func.func @transform_7(%arg0: i32, %arg1: i32, %arg2: i32) -> (i32, i32) {
    %c0_i32 = arith.constant 0 : i32
    %c0_i32_0 = arith.constant 0 : i32
    %c0_i32_1 = arith.constant 0 : i32
    return %c0_i32, %c0_i32_0 : i32, i32
  }
  func.func @transform_8(%arg0: i32, %arg1: i32, %arg2: i32) -> (i32, i32, i32) {
    %c0_i32 = arith.constant 0 : i32
    %c0_i32_0 = arith.constant 0 : i32
    return %arg0, %arg1, %c0_i32 : i32, i32, i32
  }
}

</mosaic_0001>

<llo_original>
// kernel: tpu_custom_call.1
$region0: #{tpu_custom_call.1}
  #allocation0 [shape = 'u32[]', space=smem, size = 0x4, offset = 0x4, fixed_abs, tag = 'smem constant byte address 0x4 - core index']
  #allocation1 [shape = 'u32[72,128]{1,0:T(1,128)}', space=vmem, size = 0x9000, scoped, tag = 'internal scratch']
  #allocation2 [shape = 'f32[8,32]{1,0:T(8,128)}', space=vmem, size = 0x1000, scoped, tag = 'scratch operand']
  #allocation3 [shape = 'f32[4,8,1]{2,1,0:T(8,128)}', space=vmem, size = 0x4000, scoped, tag = 'scratch operand']
  #allocation4 [shape = 'f32[4,8,1]{2,1,0:T(8,128)}', space=vmem, size = 0x4000, scoped, tag = 'scratch operand']
  #allocation5 [shape = 'f32[8,32]{1,0:T(8,128)}', space=vmem, size = 0x1000, scoped, tag = 'scratch operand']
  %s0 = inlined_call_operand.hbm [shape: f32[2,8,32], index: 0, kind: input, shape index: {}]
  %s1 = inlined_call_operand.hbm [shape: f32[2,8,32], index: 1, kind: input, shape index: {}]
  %s2 = inlined_call_operand.hbm [shape: f32[32,32], index: 2, kind: input, shape index: {}]
  %s3 = inlined_call_operand.vmem [shape: f32[1,32], index: 3, kind: input, shape index: {}]
  %s4 = inlined_call_operand.hbm [shape: f32[32,64], index: 4, kind: input, shape index: {}]
  %s5 = inlined_call_operand.vmem [shape: f32[1,64], index: 5, kind: input, shape index: {}]
  %s6 = inlined_call_operand.hbm [shape: f32[32,32], index: 6, kind: input, shape index: {}]
  %s7 = inlined_call_operand.vmem [shape: f32[1,32], index: 7, kind: input, shape index: {}]
  %s8 = inlined_call_operand.hbm [shape: f32[2,8,32], index: 8, kind: output, shape index: {}]
  %s9 = sld [smem:[#allocation0]]
  $region101: #{tpu_custom_call.1} parent=0
    _
  %s11 = ssub.s32 1, %s9
  %s12 = scalar_select 0, %s11, %s9
  $region1: #{tpu_custom_call.1} parent=0
    #allocation6 [shape = 'u8[8192]{0}', space=vmem, size = 0x2000, scoped, tag = 'input window, operand 0']
    #allocation7 [shape = 's32[2]{0}', space=sflag, size = 0x8, scoped, tag = 'scoped memory for tpu_custom_call.1']
    #allocation8 [shape = 's32[2]{0}', space=sflag, size = 0x8, scoped, tag = 'scoped memory for tpu_custom_call.1']
    #allocation9 [shape = 'u8[8192]{0}', space=vmem, size = 0x2000, scoped, tag = 'input window, operand 1']
    #allocation10 [shape = 's32[2]{0}', space=sflag, size = 0x8, scoped, tag = 'scoped memory for tpu_custom_call.1']
    #allocation11 [shape = 'u8[16384]{0}', space=vmem, size = 0x4000, scoped, tag = 'input window, operand 2, single buffered']
    #allocation12 [shape = 'u8[16384]{0}', space=vmem, size = 0x4000, scoped, tag = 'input window, operand 4, single buffered']
    #allocation13 [shape = 's32[1]{0}', space=sflag, size = 0x4, scoped, tag = 'scoped memory for tpu_custom_call.1']
    #allocation14 [shape = 'u8[16384]{0}', space=vmem, size = 0x4000, scoped, tag = 'input window, operand 6, single buffered']
    #allocation15 [shape = 'u8[8192]{0}', space=vmem, size = 0x2000, scoped, tag = 'output window, operand 0']
    %13 = vsyncpa [#allocation7], 0
    %s14 = scalar_lea.sflag [#allocation7], 1
    %15 = vsyncpa %s14, 0
    %16 = vsyncpa [#allocation10], 0
    %s17 = scalar_lea.sflag [#allocation10], 1
    %18 = vsyncpa %s17, 0
    %19 = vsyncpa [#allocation13], 0
    %20 = vsyncpa [#allocation8], 0
    %s21 = scalar_lea.sflag [#allocation8], 1
    %22 = vsyncpa %s21, 0
    loop: start=0, step=1, limit=4
    $region2: #{tpu_custom_call.1} parent=1 // loop_pre_header
      _
    $region3: #{tpu_custom_call.1} parent=1 // loop_header
      %s24 = sphi 0, %s28
      %p25 = scmp.ge.s32.totalorder %s24, 4
      %s31 = sphi 0, %s50
      %s32 = sphi 0, %s46
      %s33 = sphi 0, %s42
      %s34 = sphi 0, %s31
      %s35 = sphi 0, %s32
      %s36 = sphi 0, %s33
      %s37 = sphi 0, %s34
      %s38 = sphi 0, %s35
      %s39 = sphi 0, %s36
      %s55 = sphi 0, %s57
      %s58 = sphi 0, %s55
      %s59 = sphi 0, %s58
      %s75 = sphi 0, %s59
      %s83 = sphi 0, %s85
      %s86 = sphi 0, %s83
      %s87 = sphi 0, %s86
      %s103 = sphi 0, %s87
      %s107 = sphi 0, %s107
      %s109 = sphi 0, %s107
      %s110 = sphi 0, %s109
      %s124 = sphi 0, %s110
      %s128 = sphi 0, %s128
      %s130 = sphi 0, %s128
      %s131 = sphi 0, %s130
      %s145 = sphi 0, %s131
      %s149 = sphi 0, %s149
      %s151 = sphi 0, %s149
      %s152 = sphi 0, %s151
      %s166 = sphi 0, %s152
      %s170 = sphi 0, %s170
      %s172 = sphi 0, %s170
      %s173 = sphi 0, %s172
      %s187 = sphi 0, %s173
      %s191 = sphi 0, %s191
      %s193 = sphi 0, %s191
      %s194 = sphi 0, %s193
      %s208 = sphi 0, %s194
      %s212 = sphi 0, %s212
      %s214 = sphi 0, %s212
      %s215 = sphi 0, %s214
      %s229 = sphi 0, %s215
      %s237 = sphi 0, %s239
      %s240 = sphi 0, %s237
      %s241 = sphi 0, %s240
      %s257 = sphi 0, %s241
    $region4: #{tpu_custom_call.1} parent=1 // loop_header_branch
      %27 = sbr.rel (%p25) target = $region8
    $region5: #{tpu_custom_call.1} parent=1 // loop_body
      %s29 = ssub.s32 %s24, 1
      %s30 = ssub.s32 %s24, 2
      %s40 = sadd.s32 1, %s33
      %p41 = scmp.ge.s32.totalorder %s40, 1
      %s42 = scalar_select %p41, 0, %s40
      %s43 = sadd.s32 1, %s32
      %s44 = scalar_select %p41, %s43, %s32
      %p45 = scmp.ge.s32.totalorder %s44, 1
      %s46 = scalar_select %p45, 0, %s44
      %s47 = sadd.s32 1, %s31
      %s48 = scalar_select %p45, %s47, %s31
      %p49 = scmp.ge.s32.totalorder %s48, 2
      %s50 = scalar_select %p49, 0, %s48
      %s51 = ssub.s32 %s31, %s50
      %s52 = ssub.s32 %s32, %s46
      %s53 = sor.u32 %s51, %s52
      %p54 = scmp.eq.s32.totalorder %s53, 0
      %s56 = sadd.s32 %s55, 1
      %s57 = scalar_select %p54, %s55, %s56
      %p60 = pneg %p54
      %p61 = scmp.eq.s32.totalorder %s24, 1
      %p62 = por %p60, %p61
      %p63 = scmp.ne.s32.totalorder %s55, %s58
      %p64 = scmp.eq.s32.totalorder %s24, 0
      %p65 = por %p63, %p64
      %p66 = scmp.ne.s32.totalorder %s55, %s58
      %p67 = scmp.eq.s32.totalorder %s29, 1
      %p68 = por %p66, %p67
      %p69 = scmp.ne.s32.totalorder %s58, %s59
      %p70 = scmp.eq.s32.totalorder %s29, 0
      %p71 = por %p69, %p70
      %p72 = scmp.ne.s32.totalorder %s58, %s59
      %p73 = scmp.eq.s32.totalorder %s30, 1
      %p74 = por %p72, %p73
      %p76 = scmp.ne.s32.totalorder %s59, %s75
      %p77 = scmp.eq.s32.totalorder %s30, 0
      %p78 = por %p76, %p77
      %s79 = ssub.s32 %s31, %s50
      %s80 = ssub.s32 %s33, %s42
      %s81 = sor.u32 %s79, %s80
      %p82 = scmp.eq.s32.totalorder %s81, 0
      %s84 = sadd.s32 %s83, 1
      %s85 = scalar_select %p82, %s83, %s84
      %p88 = pneg %p82
      %p89 = scmp.eq.s32.totalorder %s24, 1
      %p90 = por %p88, %p89
      %p91 = scmp.ne.s32.totalorder %s83, %s86
      %p92 = scmp.eq.s32.totalorder %s24, 0
      %p93 = por %p91, %p92
      %p94 = scmp.ne.s32.totalorder %s83, %s86
      %p95 = scmp.eq.s32.totalorder %s29, 1
      %p96 = por %p94, %p95
      %p97 = scmp.ne.s32.totalorder %s86, %s87
      %p98 = scmp.eq.s32.totalorder %s29, 0
      %p99 = por %p97, %p98
      %p100 = scmp.ne.s32.totalorder %s86, %s87
      %p101 = scmp.eq.s32.totalorder %s30, 1
      %p102 = por %p100, %p101
      %p104 = scmp.ne.s32.totalorder %s87, %s103
      %p105 = scmp.eq.s32.totalorder %s30, 0
      %p106 = por %p104, %p105
      %s108 = sadd.s32 %s107, 1
      %p111 = scmp.eq.s32.totalorder %s24, 1
      %p112 = scmp.ne.s32.totalorder %s107, %s109
      %p113 = scmp.eq.s32.totalorder %s24, 0
      %p114 = por %p112, %p113
      %p115 = scmp.ne.s32.totalorder %s107, %s109
      %p116 = scmp.eq.s32.totalorder %s29, 1
      %p117 = por %p115, %p116
      %p118 = scmp.ne.s32.totalorder %s109, %s110
      %p119 = scmp.eq.s32.totalorder %s29, 0
      %p120 = por %p118, %p119
      %p121 = scmp.ne.s32.totalorder %s109, %s110
      %p122 = scmp.eq.s32.totalorder %s30, 1
      %p123 = por %p121, %p122
      %p125 = scmp.ne.s32.totalorder %s110, %s124
      %p126 = scmp.eq.s32.totalorder %s30, 0
      %p127 = por %p125, %p126
      %s129 = sadd.s32 %s128, 1
      %p132 = scmp.eq.s32.totalorder %s24, 1
      %p133 = scmp.ne.s32.totalorder %s128, %s130
      %p134 = scmp.eq.s32.totalorder %s24, 0
      %p135 = por %p133, %p134
      %p136 = scmp.ne.s32.totalorder %s128, %s130
      %p137 = scmp.eq.s32.totalorder %s29, 1
      %p138 = por %p136, %p137
      %p139 = scmp.ne.s32.totalorder %s130, %s131
      %p140 = scmp.eq.s32.totalorder %s29, 0
      %p141 = por %p139, %p140
      %p142 = scmp.ne.s32.totalorder %s130, %s131
      %p143 = scmp.eq.s32.totalorder %s30, 1
      %p144 = por %p142, %p143
      %p146 = scmp.ne.s32.totalorder %s131, %s145
      %p147 = scmp.eq.s32.totalorder %s30, 0
      %p148 = por %p146, %p147
      %s150 = sadd.s32 %s149, 1
      %p153 = scmp.eq.s32.totalorder %s24, 1
      %p154 = scmp.ne.s32.totalorder %s149, %s151
      %p155 = scmp.eq.s32.totalorder %s24, 0
      %p156 = por %p154, %p155
      %p157 = scmp.ne.s32.totalorder %s149, %s151
      %p158 = scmp.eq.s32.totalorder %s29, 1
      %p159 = por %p157, %p158
      %p160 = scmp.ne.s32.totalorder %s151, %s152
      %p161 = scmp.eq.s32.totalorder %s29, 0
      %p162 = por %p160, %p161
      %p163 = scmp.ne.s32.totalorder %s151, %s152
      %p164 = scmp.eq.s32.totalorder %s30, 1
      %p165 = por %p163, %p164
      %p167 = scmp.ne.s32.totalorder %s152, %s166
      %p168 = scmp.eq.s32.totalorder %s30, 0
      %p169 = por %p167, %p168
      %s171 = sadd.s32 %s170, 1
      %p174 = scmp.eq.s32.totalorder %s24, 1
      %p175 = scmp.ne.s32.totalorder %s170, %s172
      %p176 = scmp.eq.s32.totalorder %s24, 0
      %p177 = por %p175, %p176
      %p178 = scmp.ne.s32.totalorder %s170, %s172
      %p179 = scmp.eq.s32.totalorder %s29, 1
      %p180 = por %p178, %p179
      %p181 = scmp.ne.s32.totalorder %s172, %s173
      %p182 = scmp.eq.s32.totalorder %s29, 0
      %p183 = por %p181, %p182
      %p184 = scmp.ne.s32.totalorder %s172, %s173
      %p185 = scmp.eq.s32.totalorder %s30, 1
      %p186 = por %p184, %p185
      %p188 = scmp.ne.s32.totalorder %s173, %s187
      %p189 = scmp.eq.s32.totalorder %s30, 0
      %p190 = por %p188, %p189
      %s192 = sadd.s32 %s191, 1
      %p195 = scmp.eq.s32.totalorder %s24, 1
      %p196 = scmp.ne.s32.totalorder %s191, %s193
      %p197 = scmp.eq.s32.totalorder %s24, 0
      %p198 = por %p196, %p197
      %p199 = scmp.ne.s32.totalorder %s191, %s193
      %p200 = scmp.eq.s32.totalorder %s29, 1
      %p201 = por %p199, %p200
      %p202 = scmp.ne.s32.totalorder %s193, %s194
      %p203 = scmp.eq.s32.totalorder %s29, 0
      %p204 = por %p202, %p203
      %p205 = scmp.ne.s32.totalorder %s193, %s194
      %p206 = scmp.eq.s32.totalorder %s30, 1
      %p207 = por %p205, %p206
      %p209 = scmp.ne.s32.totalorder %s194, %s208
      %p210 = scmp.eq.s32.totalorder %s30, 0
      %p211 = por %p209, %p210
      %s213 = sadd.s32 %s212, 1
      %p216 = scmp.eq.s32.totalorder %s24, 1
      %p217 = scmp.ne.s32.totalorder %s212, %s214
      %p218 = scmp.eq.s32.totalorder %s24, 0
      %p219 = por %p217, %p218
      %p220 = scmp.ne.s32.totalorder %s212, %s214
      %p221 = scmp.eq.s32.totalorder %s29, 1
      %p222 = por %p220, %p221
      %p223 = scmp.ne.s32.totalorder %s214, %s215
      %p224 = scmp.eq.s32.totalorder %s29, 0
      %p225 = por %p223, %p224
      %p226 = scmp.ne.s32.totalorder %s214, %s215
      %p227 = scmp.eq.s32.totalorder %s30, 1
      %p228 = por %p226, %p227
      %p230 = scmp.ne.s32.totalorder %s215, %s229
      %p231 = scmp.eq.s32.totalorder %s30, 0
      %p232 = por %p230, %p231
      %s233 = ssub.s32 %s31, %s50
      %s234 = ssub.s32 %s32, %s46
      %s235 = sor.u32 %s233, %s234
      %p236 = scmp.eq.s32.totalorder %s235, 0
      %s238 = sadd.s32 %s237, 1
      %s239 = scalar_select %p236, %s237, %s238
      %p242 = pneg %p236
      %p243 = scmp.eq.s32.totalorder %s24, 1
      %p244 = por %p242, %p243
      %p245 = scmp.ne.s32.totalorder %s237, %s240
      %p246 = scmp.eq.s32.totalorder %s24, 0
      %p247 = por %p245, %p246
      %p248 = scmp.ne.s32.totalorder %s237, %s240
      %p249 = scmp.eq.s32.totalorder %s29, 1
      %p250 = por %p248, %p249
      %p251 = scmp.ne.s32.totalorder %s240, %s241
      %p252 = scmp.eq.s32.totalorder %s29, 0
      %p253 = por %p251, %p252
      %p254 = scmp.ne.s32.totalorder %s240, %s241
      %p255 = scmp.eq.s32.totalorder %s30, 1
      %p256 = por %p254, %p255
      %p258 = scmp.ne.s32.totalorder %s241, %s257
      %p259 = scmp.eq.s32.totalorder %s30, 0
      %p260 = por %p258, %p259
      %p261 = scmp.le.s32.totalorder 1, %s24
      %p262 = scmp.lt.s32.totalorder %s24, 3
      %p263 = pnand %p261, %p262
      %p264 = pneg %p263
      // Predicated region
      $region9: #{tpu_custom_call.1} parent=5 // pred_check
        _
      $region10: #{tpu_custom_call.1} parent=5 // pred_check_branch
        %266 = sbr.rel (%p263) target = $region12
      $region11: #{tpu_custom_call.1} parent=5 // pred_region
        %s267 = ssub.s32 %s24, 1
        // Predicated region
        $region13: #{tpu_custom_call.1} parent=11 // pred_check
          %p268 = pneg %p120
        $region14: #{tpu_custom_call.1} parent=11 // pred_check_branch
          %270 = sbr.rel (%p268) target = $region16
        $region15: #{tpu_custom_call.1} parent=11 // pred_region
          %272 = vsyncadd [#allocation10], 0
          %s273 = sshll.u32 %s2, 4
          %s274 = int_to_ptr.hbm [resolvable:$true] %s273
          %s275 = sshll.u32 [#allocation11], 4
          %s276 = int_to_ptr.vmem [resolvable:$true] %s275
          %281 = dma.hbm_to_vmem [thread:$0]  %s274, 512, %s276, [#allocation10], 128, 128, 8
        $region16: #{tpu_custom_call.1} parent=11 // pred_fallthru
          _
        // Predicated region
        $region17: #{tpu_custom_call.1} parent=11 // pred_check
          %p282 = pneg %p141
        $region18: #{tpu_custom_call.1} parent=11 // pred_check_branch
          %284 = sbr.rel (%p282) target = $region20
        $region19: #{tpu_custom_call.1} parent=11 // pred_region
          _
        $region20: #{tpu_custom_call.1} parent=11 // pred_fallthru
          _
        // Predicated region
        $region21: #{tpu_custom_call.1} parent=11 // pred_check
          %p285 = pneg %p162
        $region22: #{tpu_custom_call.1} parent=11 // pred_check_branch
          %287 = sbr.rel (%p285) target = $region24
        $region23: #{tpu_custom_call.1} parent=11 // pred_region
          %289 = vsyncadd [#allocation13], 0
          %s290 = sshll.u32 %s4, 4
          %s291 = int_to_ptr.hbm [resolvable:$true] %s290
          %s292 = sshll.u32 [#allocation12], 4
          %s293 = int_to_ptr.vmem [resolvable:$true] %s292
          %298 = dma.hbm_to_vmem [thread:$0]  %s291, 512, %s293, [#allocation13], 128, 128, 8
        $region24: #{tpu_custom_call.1} parent=11 // pred_fallthru
          _
        // Predicated region
        $region25: #{tpu_custom_call.1} parent=11 // pred_check
          %p299 = pneg %p183
        $region26: #{tpu_custom_call.1} parent=11 // pred_check_branch
          %301 = sbr.rel (%p299) target = $region28
        $region27: #{tpu_custom_call.1} parent=11 // pred_region
          _
        $region28: #{tpu_custom_call.1} parent=11 // pred_fallthru
          _
        // Predicated region
        $region29: #{tpu_custom_call.1} parent=11 // pred_check
          %p302 = pneg %p204
        $region30: #{tpu_custom_call.1} parent=11 // pred_check_branch
          %304 = sbr.rel (%p302) target = $region32
        $region31: #{tpu_custom_call.1} parent=11 // pred_region
          %306 = vsyncadd [#allocation13], 0
          %s307 = sshll.u32 %s6, 4
          %s308 = int_to_ptr.hbm [resolvable:$true] %s307
          %s309 = sshll.u32 [#allocation14], 4
          %s310 = int_to_ptr.vmem [resolvable:$true] %s309
          %315 = dma.hbm_to_vmem [thread:$0]  %s308, 512, %s310, [#allocation13], 128, 128, 8
        $region32: #{tpu_custom_call.1} parent=11 // pred_fallthru
          _
        // Predicated region
        $region33: #{tpu_custom_call.1} parent=11 // pred_check
          %p316 = pneg %p225
        $region34: #{tpu_custom_call.1} parent=11 // pred_check_branch
          %318 = sbr.rel (%p316) target = $region36
        $region35: #{tpu_custom_call.1} parent=11 // pred_region
          _
        $region36: #{tpu_custom_call.1} parent=11 // pred_fallthru
          _
      $region12: #{tpu_custom_call.1} parent=5 // pred_fallthru
        _
      %p319 = scmp.lt.s32.totalorder %s24, 2
      // Predicated region
      $region37: #{tpu_custom_call.1} parent=5 // pred_check
        %p320 = pneg %p319
      $region38: #{tpu_custom_call.1} parent=5 // pred_check_branch
        %322 = sbr.rel (%p320) target = $region40
      $region39: #{tpu_custom_call.1} parent=5 // pred_region
        // Predicated region
        $region41: #{tpu_custom_call.1} parent=39 // pred_check
          %p323 = pneg %p65
        $region42: #{tpu_custom_call.1} parent=39 // pred_check_branch
          %325 = sbr.rel (%p323) target = $region44
        $region43: #{tpu_custom_call.1} parent=39 // pred_region
          %s326 = sand.u32 %s55, 1
          %s327 = scalar_lea.sflag [#allocation7], %s326
          %s328 = sand.u32 %s55, 1
          %s329 = smul.addr %s328, 8
          %s330 = scalar_lea.vmem [#allocation6], %s329
          %332 = vsyncadd %s327, 0
          %s333 = sadd.s32 %s32, %s31
          %s334 = smul.addr %s333, 8
          %s335 = scalar_lea.hbm %s0, %s334
          %s337 = sshll.u32 %s335, 4
          %s338 = int_to_ptr.hbm [resolvable:$true] %s337
          %s339 = sshll.u32 %s330, 4
          %s340 = int_to_ptr.vmem [resolvable:$true] %s339
          %342 = dma.hbm_to_vmem [thread:$0]  %s338, 128, %s340, %s327
        $region44: #{tpu_custom_call.1} parent=39 // pred_fallthru
          _
        // Predicated region
        $region45: #{tpu_custom_call.1} parent=39 // pred_check
          %p343 = pneg %p93
        $region46: #{tpu_custom_call.1} parent=39 // pred_check_branch
          %345 = sbr.rel (%p343) target = $region48
        $region47: #{tpu_custom_call.1} parent=39 // pred_region
          %s346 = sand.u32 %s24, 1
          %s347 = scalar_lea.sflag [#allocation10], %s346
          %s348 = sand.u32 %s83, 1
          %s349 = smul.addr %s348, 8
          %s350 = scalar_lea.vmem [#allocation9], %s349
          %352 = vsyncadd %s347, 0
          %s353 = sadd.s32 %s33, %s31
          %s354 = smul.addr %s353, 8
          %s355 = scalar_lea.hbm %s1, %s354
          %s357 = sshll.u32 %s355, 4
          %s358 = int_to_ptr.hbm [resolvable:$true] %s357
          %s359 = sshll.u32 %s350, 4
          %s360 = int_to_ptr.vmem [resolvable:$true] %s359
          %362 = dma.hbm_to_vmem [thread:$0]  %s358, 128, %s360, %s347
        $region48: #{tpu_custom_call.1} parent=39 // pred_fallthru
          _
      $region40: #{tpu_custom_call.1} parent=5 // pred_fallthru
        _
      %p363 = scmp.le.s32.totalorder 1, %s24
      %p364 = scmp.lt.s32.totalorder %s24, 3
      %p365 = pnand %p363, %p364
      %p366 = pneg %p365
      // Predicated region
      $region49: #{tpu_custom_call.1} parent=5 // pred_check
        _
      $region50: #{tpu_custom_call.1} parent=5 // pred_check_branch
        %368 = sbr.rel (%p365) target = $region52
      $region51: #{tpu_custom_call.1} parent=5 // pred_region
        %s369 = ssub.s32 %s24, 1
        %s370 = sand.u32 %s58, 1
        %s371 = scalar_lea.sflag [#allocation7], %s370
        %s372 = sand.u32 %s58, 1
        %s373 = smul.addr %s372, 8
        %s374 = scalar_lea.vmem [#allocation6], %s373
        // Predicated region
        $region53: #{tpu_custom_call.1} parent=51 // pred_check
          %p375 = pneg %p71
        $region54: #{tpu_custom_call.1} parent=51 // pred_check_branch
          %377 = sbr.rel (%p375) target = $region56
        $region55: #{tpu_custom_call.1} parent=51 // pred_region
          %379 = dma.done %s371, 128
        $region56: #{tpu_custom_call.1} parent=51 // pred_fallthru
          _
        %s380 = sand.u32 %s29, 1
        %s381 = scalar_lea.sflag [#allocation10], %s380
        %s382 = sand.u32 %s86, 1
        %s383 = smul.addr %s382, 8
        %s384 = scalar_lea.vmem [#allocation9], %s383
        // Predicated region
        $region57: #{tpu_custom_call.1} parent=51 // pred_check
          %p385 = pneg %p99
        $region58: #{tpu_custom_call.1} parent=51 // pred_check_branch
          %387 = sbr.rel (%p385) target = $region60
        $region59: #{tpu_custom_call.1} parent=51 // pred_region
          %389 = dma.done %s381, 128
        $region60: #{tpu_custom_call.1} parent=51 // pred_fallthru
          _
        // Predicated region
        $region61: #{tpu_custom_call.1} parent=51 // pred_check
          %p390 = pneg %p120
        $region62: #{tpu_custom_call.1} parent=51 // pred_check_branch
          %392 = sbr.rel (%p390) target = $region64
        $region63: #{tpu_custom_call.1} parent=51 // pred_region
          %394 = dma.done [#allocation10], 512
        $region64: #{tpu_custom_call.1} parent=51 // pred_fallthru
          _
        // Predicated region
        $region65: #{tpu_custom_call.1} parent=51 // pred_check
          %p395 = pneg %p162
        $region66: #{tpu_custom_call.1} parent=51 // pred_check_branch
          %397 = sbr.rel (%p395) target = $region68
        $region67: #{tpu_custom_call.1} parent=51 // pred_region
          %399 = dma.done [#allocation13], 512
        $region68: #{tpu_custom_call.1} parent=51 // pred_fallthru
          _
        // Predicated region
        $region69: #{tpu_custom_call.1} parent=51 // pred_check
          %p400 = pneg %p204
        $region70: #{tpu_custom_call.1} parent=51 // pred_check_branch
          %402 = sbr.rel (%p400) target = $region72
        $region71: #{tpu_custom_call.1} parent=51 // pred_region
          %404 = dma.done [#allocation13], 512
        $region72: #{tpu_custom_call.1} parent=51 // pred_fallthru
          _
        %s405 = sand.u32 %s58, 1
        %s406 = scalar_lea.sflag [#allocation7], %s405
        %s407 = sand.u32 %s58, 1
        %s408 = smul.addr %s407, 8
        %s409 = scalar_lea.vmem [#allocation6], %s408
        %p410 = pneg %p71
        %p411 = pneg %p68
        %s412 = sand.u32 %s29, 1
        %s413 = scalar_lea.sflag [#allocation10], %s412
        %s414 = sand.u32 %s86, 1
        %s415 = smul.addr %s414, 8
        %s416 = scalar_lea.vmem [#allocation9], %s415
        %p417 = pneg %p99
        %p418 = pneg %p96
        %p419 = pneg %p120
        %p420 = pneg %p117
        %p421 = pneg %p141
        %p422 = pneg %p138
        %p423 = pneg %p162
        %p424 = pneg %p159
        %p425 = pneg %p183
        %p426 = pneg %p180
        %p427 = pneg %p204
        %p428 = pneg %p201
        %p429 = pneg %p225
        %p430 = pneg %p222
        %p431 = pneg %p253
        %p432 = pneg %p250
        %s433 = sand.u32 %s240, 1
        %s434 = scalar_lea.sflag [#allocation8], %s433
        %s435 = sand.u32 %s240, 1
        %s436 = smul.addr %s435, 8
        %s437 = scalar_lea.vmem [#allocation15], %s436
        %s438 = smul.u32 %s35, 8
        %s439 = sadd.s32 %s438, 7
        %s440 = smul.u32 %s36, 8
        %s441 = sadd.s32 %s440, 7
        %p442 = scmp.eq.s32.totalorder %s36, 0
        // Predicated region
        $region73: #{tpu_custom_call.1} parent=51 // pred_check
          %p443 = pneg %p442
        $region74: #{tpu_custom_call.1} parent=51 // pred_check_branch
          %445 = sbr.rel (%p443) target = $region76
        $region75: #{tpu_custom_call.1} parent=51 // pred_region
          %v446 = vld [vmem:[%s374] sm:$0xff]
          %v447 = vld [vmem:[#allocation11] sm:$0xff]
          %v448 = vld [vmem:[#allocation11 + $0x8] sm:$0xff]
          %v449 = vld [vmem:[#allocation11 + $0x10] sm:$0xff]
          %v450 = vld [vmem:[#allocation11 + $0x18] sm:$0xff]
          %v451 = vld [vmem:[%s3] sm:$0x1]
          %v453 = vperm.slane %v451, 0
          %vm455 = vcmask 261120
          %v457 = vsel %vm455, %v446, 0
          %459 = vmatpush.msra.mxu0 0.0
          %460 = vmatpush.msra.mxu0 0.0
          %461 = vmatpush.msra.mxu0 0.0
          %462 = vmatpush.msra.mxu0 0.0
          %463 = vmatpush.msra.mxu0 0.0
          %464 = vmatpush.msra.mxu0 0.0
          %465 = vmatpush.msra.mxu0 0.0
          %466 = vmatpush.msra.mxu0 0.0
          %467 = vmatpush.msra.mxu0 0.0
          %468 = vmatpush.msra.mxu0 0.0
          %469 = vmatpush.msra.mxu0 0.0
          %470 = vmatpush.msra.mxu0 0.0
          %471 = vmatpush.msra.mxu0 %v450
          %472 = vmatpush.msra.mxu0 %v449
          %473 = vmatpush.msra.mxu0 %v448
          %474 = vmatpush.msra.mxu0 %v447
          %475 = vmatmul.f32.gmra.mxu0 %v457
          %v476 = vpop.f32.mrf.mxu0
          %v477 = vadd.f32 %v453, %v476
          %478 = vdwg.mxu0
          %479 = vst.msk [vmem:[#allocation2] sm:$0xff] %vm455, %v477
          %vm480 = vcmask 7168
          %481 = vst.msk [vmem:[#allocation3] sm:$0xff] %vm480, -inf
          %482 = vst.msk [vmem:[#allocation3 + $0x8] sm:$0xff] %vm480, -inf
          %483 = vst.msk [vmem:[#allocation3 + $0x10] sm:$0xff] %vm480, -inf
          %484 = vst.msk [vmem:[#allocation3 + $0x18] sm:$0xff] %vm480, -inf
          %485 = vst.msk [vmem:[#allocation4] sm:$0xff] %vm480, 0.0
          %486 = vst.msk [vmem:[#allocation4 + $0x8] sm:$0xff] %vm480, 0.0
          %487 = vst.msk [vmem:[#allocation4 + $0x10] sm:$0xff] %vm480, 0.0
          %488 = vst.msk [vmem:[#allocation4 + $0x18] sm:$0xff] %vm480, 0.0
          %489 = vst.msk [vmem:[#allocation5] sm:$0xff] %vm455, 0.0
        $region76: #{tpu_custom_call.1} parent=51 // pred_fallthru
          _
        %p490 = scmp.le.s32.totalorder %s441, %s438
        // Predicated region
        $region77: #{tpu_custom_call.1} parent=51 // pred_check
          %p491 = pneg %p490
        $region78: #{tpu_custom_call.1} parent=51 // pred_check_branch
          %493 = sbr.rel (%p491) target = $region80
        $region79: #{tpu_custom_call.1} parent=51 // pred_region
          %v494 = vld [vmem:[%s384] sm:$0xff]
          %v495 = vld [vmem:[#allocation12] sm:$0xff]
          %v496 = vld [vmem:[#allocation12 + $0x8] sm:$0xff]
          %v497 = vld [vmem:[#allocation12 + $0x10] sm:$0xff]
          %v498 = vld [vmem:[#allocation12 + $0x18] sm:$0xff]
          %v499 = vld [vmem:[%s5] sm:$0x1]
          %v501 = vperm.slane %v499, 0
          %vm503 = vcmask 261120
          %v505 = vsel %vm503, %v494, 0
          %507 = vmatpush.msra.mxu0 0.0
          %508 = vmatpush.msra.mxu0 0.0
          %509 = vmatpush.msra.mxu0 0.0
          %510 = vmatpush.msra.mxu0 0.0
          %511 = vmatpush.msra.mxu0 0.0
          %512 = vmatpush.msra.mxu0 0.0
          %513 = vmatpush.msra.mxu0 0.0
          %514 = vmatpush.msra.mxu0 0.0
          %515 = vmatpush.msra.mxu0 0.0
          %516 = vmatpush.msra.mxu0 0.0
          %517 = vmatpush.msra.mxu0 0.0
          %518 = vmatpush.msra.mxu0 0.0
          %519 = vmatpush.msra.mxu0 %v498
          %520 = vmatpush.msra.mxu0 %v497
          %521 = vmatpush.msra.mxu0 %v496
          %522 = vmatpush.msra.mxu0 %v495
          %523 = vmatmul.f32.gmra.mxu0 %v505
          %v524 = vpop.f32.mrf.mxu0
          %v525 = vadd.f32 %v501, %v524
          %526 = vdwg.mxu0
          %v527 = vld [vmem:[#allocation2] sm:$0xff]
          %vm528 = vcmask 64512
          %v530 = vsel %vm528, %v527, 0
          %v533 = vsel %vm528, %v525, 0
          %535 = vmatpush.xpose.msra.mxu0 0.0
          %536 = vmatpush.xpose.msra.mxu0 0.0
          %537 = vmatpush.xpose.msra.mxu0 0.0
          %538 = vmatpush.xpose.msra.mxu0 0.0
          %539 = vmatpush.xpose.msra.mxu0 0.0
          %540 = vmatpush.xpose.msra.mxu0 0.0
          %541 = vmatpush.xpose.msra.mxu0 0.0
          %542 = vmatpush.xpose.msra.mxu0 0.0
          %543 = vmatpush.xpose.msra.mxu0 0.0
          %544 = vmatpush.xpose.msra.mxu0 0.0
          %545 = vmatpush.xpose.msra.mxu0 0.0
          %546 = vmatpush.xpose.msra.mxu0 0.0
          %547 = vmatpush.xpose.msra.mxu0 0.0
          %548 = vmatpush.xpose.msra.mxu0 0.0
          %549 = vmatpush.xpose.msra.mxu0 0.0
          %550 = vmatpush.xpose.msra.mxu0 %v533
          %551 = vmatmul.f32.gmra.mxu0 %v530
          %v552 = vpop.f32.mrf.mxu0
          %v553 = vadd.f32 0.0, %v552
          %554 = vdwg.mxu0
          %v555 = vld [vmem:[#allocation3] sm:$0xff]
          %v556 = vsel %vm528, %v553, -inf
          %557 = vmax.xlane.f32.xlu0 %v556
          %v558 = vpop.xlane.xlu0 %557
          %v559 = vmax.f32 %v555, %v558
          %v560 = vsub.f32 %v555, %v559
          %v561 = vmul.f32 %v560, 1.442695
          %v562 = vpow.pop %v561
          %564 = vset.pattern.permute.xlu0 0
          %565 = vperm.xlu0 %564, %v559
          %v566 = vpop.permute.xlu0 %565
          %v568 = vsub.f32 %v553, %v566
          %v569 = vmul.f32 %v568, 1.442695
          %v570 = vpow.pop %v569
          %v571 = vld [vmem:[#allocation4] sm:$0xff]
          %v572 = vmul.f32 %v562, %v571
          %v573 = vsel %vm528, %v570, 0.0
          %574 = vadd.xlane.f32.xlu0 %v573
          %v575 = vpop.xlane.xlu0 %574
          %v576 = vadd.f32 %v572, %v575
          %vm577 = vcmask 7168
          %578 = vst.msk [vmem:[#allocation4] sm:$0xff] %vm577, %v576
          %v579 = vld [vmem:[#allocation5] sm:$0xff]
          %581 = vset.pattern.permute.xlu0 0
          %582 = vperm.xlu0 %581, %v562
          %v583 = vpop.permute.xlu0 %582
          %v585 = vmul.f32 %v583, %v579
          %586 = vrot.lane.b32.xlu0 %v525, 96
          %v587 = vpop.permute.xlu0 %586
          %v590 = vsel %vm528, %v570, 0
          %592 = vmatpush.msra.mxu0 0.0
          %593 = vmatpush.msra.mxu0 0.0
          %594 = vmatpush.msra.mxu0 0.0
          %595 = vmatpush.msra.mxu0 0.0
          %596 = vmatpush.msra.mxu0 0.0
          %597 = vmatpush.msra.mxu0 0.0
          %598 = vmatpush.msra.mxu0 0.0
          %599 = vmatpush.msra.mxu0 0.0
          %600 = vmatpush.msra.mxu0 0.0
          %601 = vmatpush.msra.mxu0 0.0
          %602 = vmatpush.msra.mxu0 0.0
          %603 = vmatpush.msra.mxu0 0.0
          %604 = vmatpush.msra.mxu0 0.0
          %605 = vmatpush.msra.mxu0 0.0
          %606 = vmatpush.msra.mxu0 0.0
          %607 = vmatpush.msra.mxu0 %v587
          %608 = vmatmul.f32.gmra.mxu0 %v590
          %v609 = vpop.f32.mrf.mxu0
          %v610 = vadd.f32 0.0, %v609
          %611 = vdwg.mxu0
          %v612 = vadd.f32 %v585, %v610
          %613 = vst.msk [vmem:[#allocation5] sm:$0xff] %vm528, %v612
          %614 = vst.msk [vmem:[#allocation3] sm:$0xff] %vm577, %v559
          %615 = vrot.lane.b32.xlu0 %v527, 120
          %v616 = vpop.permute.xlu0 %615
          %617 = vrot.lane.b32.xlu0 %v525, 120
          %v618 = vpop.permute.xlu0 %617
          %v619 = vsel %vm528, %v616, 0
          %v621 = vsel %vm528, %v618, 0
          %623 = vmatpush.xpose.msra.mxu0 0.0
          %624 = vmatpush.xpose.msra.mxu0 0.0
          %625 = vmatpush.xpose.msra.mxu0 0.0
          %626 = vmatpush.xpose.msra.mxu0 0.0
          %627 = vmatpush.xpose.msra.mxu0 0.0
          %628 = vmatpush.xpose.msra.mxu0 0.0
          %629 = vmatpush.xpose.msra.mxu0 0.0
          %630 = vmatpush.xpose.msra.mxu0 0.0
          %631 = vmatpush.xpose.msra.mxu0 0.0
          %632 = vmatpush.xpose.msra.mxu0 0.0
          %633 = vmatpush.xpose.msra.mxu0 0.0
          %634 = vmatpush.xpose.msra.mxu0 0.0
          %635 = vmatpush.xpose.msra.mxu0 0.0
          %636 = vmatpush.xpose.msra.mxu0 0.0
          %637 = vmatpush.xpose.msra.mxu0 0.0
          %638 = vmatpush.xpose.msra.mxu0 %v621
          %639 = vmatmul.f32.gmra.mxu0 %v619
          %v640 = vpop.f32.mrf.mxu0
          %v641 = vadd.f32 0.0, %v640
          %642 = vdwg.mxu0
          %s643 = scalar_lea.vmem [#allocation3], 8
          %v644 = vld [vmem:[%s643] sm:$0xff]
          %v645 = vsel %vm528, %v641, -inf
          %646 = vmax.xlane.f32.xlu0 %v645
          %v647 = vpop.xlane.xlu0 %646
          %v648 = vmax.f32 %v644, %v647
          %v649 = vsub.f32 %v644, %v648
          %v650 = vmul.f32 %v649, 1.442695
          %v651 = vpow.pop %v650
          %653 = vset.pattern.permute.xlu0 0
          %654 = vperm.xlu0 %653, %v648
          %v655 = vpop.permute.xlu0 %654
          %v657 = vsub.f32 %v641, %v655
          %v658 = vmul.f32 %v657, 1.442695
          %v659 = vpow.pop %v658
          %s660 = scalar_lea.vmem [#allocation4], 8
          %v661 = vld [vmem:[%s660] sm:$0xff]
          %v662 = vmul.f32 %v651, %v661
          %v663 = vsel %vm528, %v659, 0.0
          %664 = vadd.xlane.f32.xlu0 %v663
          %v665 = vpop.xlane.xlu0 %664
          %v666 = vadd.f32 %v662, %v665
          %667 = vst.msk [vmem:[%s660] sm:$0xff] %vm577, %v666
          %v668 = vld [vmem:[#allocation5] sm:$0xff]
          %670 = vset.pattern.permute.xlu0 0
          %671 = vperm.xlu0 %670, %v651
          %v672 = vpop.permute.xlu0 %671
          %v674 = vmul.f32 %v672, %v668
          %675 = vrot.lane.b32.xlu0 %v525, 88
          %v676 = vpop.permute.xlu0 %675
          %v679 = vsel %vm528, %v659, 0
          %681 = vmatpush.msra.mxu0 0.0
          %682 = vmatpush.msra.mxu0 0.0
          %683 = vmatpush.msra.mxu0 0.0
          %684 = vmatpush.msra.mxu0 0.0
          %685 = vmatpush.msra.mxu0 0.0
          %686 = vmatpush.msra.mxu0 0.0
          %687 = vmatpush.msra.mxu0 0.0
          %688 = vmatpush.msra.mxu0 0.0
          %689 = vmatpush.msra.mxu0 0.0
          %690 = vmatpush.msra.mxu0 0.0
          %691 = vmatpush.msra.mxu0 0.0
          %692 = vmatpush.msra.mxu0 0.0
          %693 = vmatpush.msra.mxu0 0.0
          %694 = vmatpush.msra.mxu0 0.0
          %695 = vmatpush.msra.mxu0 0.0
          %696 = vmatpush.msra.mxu0 %v676
          %697 = vmatmul.f32.gmra.mxu0 %v679
          %v698 = vpop.f32.mrf.mxu0
          %v699 = vadd.f32 0.0, %v698
          %700 = vdwg.mxu0
          %702 = vrot.lane.b32.xlu0 %v699, 8
          %v703 = vpop.permute.xlu0 %702
          %v705 = vadd.f32 %v674, %v703
          %vm706 = vcmask 130112
          %707 = vst.msk [vmem:[#allocation5] sm:$0xff] %vm706, %v705
          %708 = vst.msk [vmem:[%s643] sm:$0xff] %vm577, %v648
          %709 = vrot.lane.b32.xlu0 %v527, 112
          %v710 = vpop.permute.xlu0 %709
          %711 = vrot.lane.b32.xlu0 %v525, 112
          %v712 = vpop.permute.xlu0 %711
          %v713 = vsel %vm528, %v710, 0
          %v715 = vsel %vm528, %v712, 0
          %717 = vmatpush.xpose.msra.mxu0 0.0
          %718 = vmatpush.xpose.msra.mxu0 0.0
          %719 = vmatpush.xpose.msra.mxu0 0.0
          %720 = vmatpush.xpose.msra.mxu0 0.0
          %721 = vmatpush.xpose.msra.mxu0 0.0
          %722 = vmatpush.xpose.msra.mxu0 0.0
          %723 = vmatpush.xpose.msra.mxu0 0.0
          %724 = vmatpush.xpose.msra.mxu0 0.0
          %725 = vmatpush.xpose.msra.mxu0 0.0
          %726 = vmatpush.xpose.msra.mxu0 0.0
          %727 = vmatpush.xpose.msra.mxu0 0.0
          %728 = vmatpush.xpose.msra.mxu0 0.0
          %729 = vmatpush.xpose.msra.mxu0 0.0
          %730 = vmatpush.xpose.msra.mxu0 0.0
          %731 = vmatpush.xpose.msra.mxu0 0.0
          %732 = vmatpush.xpose.msra.mxu0 %v715
          %733 = vmatmul.f32.gmra.mxu0 %v713
          %v734 = vpop.f32.mrf.mxu0
          %v735 = vadd.f32 0.0, %v734
          %736 = vdwg.mxu0
          %s737 = scalar_lea.vmem [#allocation3], 16
          %v738 = vld [vmem:[%s737] sm:$0xff]
          %v739 = vsel %vm528, %v735, -inf
          %740 = vmax.xlane.f32.xlu0 %v739
          %v741 = vpop.xlane.xlu0 %740
          %v742 = vmax.f32 %v738, %v741
          %v743 = vsub.f32 %v738, %v742
          %v744 = vmul.f32 %v743, 1.442695
          %v745 = vpow.pop %v744
          %747 = vset.pattern.permute.xlu0 0
          %748 = vperm.xlu0 %747, %v742
          %v749 = vpop.permute.xlu0 %748
          %v751 = vsub.f32 %v735, %v749
          %v752 = vmul.f32 %v751, 1.442695
          %v753 = vpow.pop %v752
          %s754 = scalar_lea.vmem [#allocation4], 16
          %v755 = vld [vmem:[%s754] sm:$0xff]
          %v756 = vmul.f32 %v745, %v755
          %v757 = vsel %vm528, %v753, 0.0
          %758 = vadd.xlane.f32.xlu0 %v757
          %v759 = vpop.xlane.xlu0 %758
          %v760 = vadd.f32 %v756, %v759
          %761 = vst.msk [vmem:[%s754] sm:$0xff] %vm577, %v760
          %v762 = vld [vmem:[#allocation5] sm:$0xff]
          %764 = vset.pattern.permute.xlu0 0
          %765 = vperm.xlu0 %764, %v745
          %v766 = vpop.permute.xlu0 %765
          %v768 = vmul.f32 %v766, %v762
          %769 = vrot.lane.b32.xlu0 %v525, 80
          %v770 = vpop.permute.xlu0 %769
          %v773 = vsel %vm528, %v753, 0
          %775 = vmatpush.msra.mxu0 0.0
          %776 = vmatpush.msra.mxu0 0.0
          %777 = vmatpush.msra.mxu0 0.0
          %778 = vmatpush.msra.mxu0 0.0
          %779 = vmatpush.msra.mxu0 0.0
          %780 = vmatpush.msra.mxu0 0.0
          %781 = vmatpush.msra.mxu0 0.0
          %782 = vmatpush.msra.mxu0 0.0
          %783 = vmatpush.msra.mxu0 0.0
          %784 = vmatpush.msra.mxu0 0.0
          %785 = vmatpush.msra.mxu0 0.0
          %786 = vmatpush.msra.mxu0 0.0
          %787 = vmatpush.msra.mxu0 0.0
          %788 = vmatpush.msra.mxu0 0.0
          %789 = vmatpush.msra.mxu0 0.0
          %790 = vmatpush.msra.mxu0 %v770
          %791 = vmatmul.f32.gmra.mxu0 %v773
          %v792 = vpop.f32.mrf.mxu0
          %v793 = vadd.f32 0.0, %v792
          %794 = vdwg.mxu0
          %796 = vrot.lane.b32.xlu0 %v793, 16
          %v797 = vpop.permute.xlu0 %796
          %v799 = vadd.f32 %v768, %v797
          %vm800 = vcmask 195712
          %801 = vst.msk [vmem:[#allocation5] sm:$0xff] %vm800, %v799
          %802 = vst.msk [vmem:[%s737] sm:$0xff] %vm577, %v742
          %803 = vrot.lane.b32.xlu0 %v527, 104
          %v804 = vpop.permute.xlu0 %803
          %805 = vrot.lane.b32.xlu0 %v525, 104
          %v806 = vpop.permute.xlu0 %805
          %v807 = vsel %vm528, %v804, 0
          %v809 = vsel %vm528, %v806, 0
          %811 = vmatpush.xpose.msra.mxu0 0.0
          %812 = vmatpush.xpose.msra.mxu0 0.0
          %813 = vmatpush.xpose.msra.mxu0 0.0
          %814 = vmatpush.xpose.msra.mxu0 0.0
          %815 = vmatpush.xpose.msra.mxu0 0.0
          %816 = vmatpush.xpose.msra.mxu0 0.0
          %817 = vmatpush.xpose.msra.mxu0 0.0
          %818 = vmatpush.xpose.msra.mxu0 0.0
          %819 = vmatpush.xpose.msra.mxu0 0.0
          %820 = vmatpush.xpose.msra.mxu0 0.0
          %821 = vmatpush.xpose.msra.mxu0 0.0
          %822 = vmatpush.xpose.msra.mxu0 0.0
          %823 = vmatpush.xpose.msra.mxu0 0.0
          %824 = vmatpush.xpose.msra.mxu0 0.0
          %825 = vmatpush.xpose.msra.mxu0 0.0
          %826 = vmatpush.xpose.msra.mxu0 %v809
          %827 = vmatmul.f32.gmra.mxu0 %v807
          %v828 = vpop.f32.mrf.mxu0
          %v829 = vadd.f32 0.0, %v828
          %830 = vdwg.mxu0
          %s831 = scalar_lea.vmem [#allocation3], 24
          %v832 = vld [vmem:[%s831] sm:$0xff]
          %v833 = vsel %vm528, %v829, -inf
          %834 = vmax.xlane.f32.xlu0 %v833
          %v835 = vpop.xlane.xlu0 %834
          %v836 = vmax.f32 %v832, %v835
          %v837 = vsub.f32 %v832, %v836
          %v838 = vmul.f32 %v837, 1.442695
          %v839 = vpow.pop %v838
          %841 = vset.pattern.permute.xlu0 0
          %842 = vperm.xlu0 %841, %v836
          %v843 = vpop.permute.xlu0 %842
          %v845 = vsub.f32 %v829, %v843
          %v846 = vmul.f32 %v845, 1.442695
          %v847 = vpow.pop %v846
          %s848 = scalar_lea.vmem [#allocation4], 24
          %v849 = vld [vmem:[%s848] sm:$0xff]
          %v850 = vmul.f32 %v839, %v849
          %v851 = vsel %vm528, %v847, 0.0
          %852 = vadd.xlane.f32.xlu0 %v851
          %v853 = vpop.xlane.xlu0 %852
          %v854 = vadd.f32 %v850, %v853
          %855 = vst.msk [vmem:[%s848] sm:$0xff] %vm577, %v854
          %v856 = vld [vmem:[#allocation5] sm:$0xff]
          %858 = vset.pattern.permute.xlu0 0
          %859 = vperm.xlu0 %858, %v839
          %v860 = vpop.permute.xlu0 %859
          %v862 = vmul.f32 %v860, %v856
          %863 = vrot.lane.b32.xlu0 %v525, 72
          %v864 = vpop.permute.xlu0 %863
          %v867 = vsel %vm528, %v847, 0
          %869 = vmatpush.msra.mxu0 0.0
          %870 = vmatpush.msra.mxu0 0.0
          %871 = vmatpush.msra.mxu0 0.0
          %872 = vmatpush.msra.mxu0 0.0
          %873 = vmatpush.msra.mxu0 0.0
          %874 = vmatpush.msra.mxu0 0.0
          %875 = vmatpush.msra.mxu0 0.0
          %876 = vmatpush.msra.mxu0 0.0
          %877 = vmatpush.msra.mxu0 0.0
          %878 = vmatpush.msra.mxu0 0.0
          %879 = vmatpush.msra.mxu0 0.0
          %880 = vmatpush.msra.mxu0 0.0
          %881 = vmatpush.msra.mxu0 0.0
          %882 = vmatpush.msra.mxu0 0.0
          %883 = vmatpush.msra.mxu0 0.0
          %884 = vmatpush.msra.mxu0 %v864
          %885 = vmatmul.f32.gmra.mxu0 %v867
          %v886 = vpop.f32.mrf.mxu0
          %v887 = vadd.f32 0.0, %v886
          %888 = vdwg.mxu0
          %890 = vrot.lane.b32.xlu0 %v887, 24
          %v891 = vpop.permute.xlu0 %890
          %v893 = vadd.f32 %v862, %v891
          %vm894 = vcmask 261312
          %895 = vst.msk [vmem:[#allocation5] sm:$0xff] %vm894, %v893
          %896 = vst.msk [vmem:[%s831] sm:$0xff] %vm577, %v836
        $region80: #{tpu_custom_call.1} parent=51 // pred_fallthru
          _
        %p897 = scmp.le.s32.totalorder %s440, %s439
        %p898 = scmp.gt.s32.totalorder %s441, %s438
        %p899 = pnand %p897, %p898
        %p900 = pneg %p899
        // Predicated region
        $region81: #{tpu_custom_call.1} parent=51 // pred_check
          _
        $region82: #{tpu_custom_call.1} parent=51 // pred_check_branch
          %902 = sbr.rel (%p899) target = $region84
        $region83: #{tpu_custom_call.1} parent=51 // pred_region
          %v903 = vld [vmem:[%s384] sm:$0xff]
          %v904 = vld [vmem:[#allocation12] sm:$0xff]
          %v905 = vld [vmem:[#allocation12 + $0x8] sm:$0xff]
          %v906 = vld [vmem:[#allocation12 + $0x10] sm:$0xff]
          %v907 = vld [vmem:[#allocation12 + $0x18] sm:$0xff]
          %v908 = vld [vmem:[%s5] sm:$0x1]
          %v910 = vperm.slane %v908, 0
          %vm912 = vcmask 261120
          %v914 = vsel %vm912, %v903, 0
          %916 = vmatpush.msra.mxu0 0.0
          %917 = vmatpush.msra.mxu0 0.0
          %918 = vmatpush.msra.mxu0 0.0
          %919 = vmatpush.msra.mxu0 0.0
          %920 = vmatpush.msra.mxu0 0.0
          %921 = vmatpush.msra.mxu0 0.0
          %922 = vmatpush.msra.mxu0 0.0
          %923 = vmatpush.msra.mxu0 0.0
          %924 = vmatpush.msra.mxu0 0.0
          %925 = vmatpush.msra.mxu0 0.0
          %926 = vmatpush.msra.mxu0 0.0
          %927 = vmatpush.msra.mxu0 0.0
          %928 = vmatpush.msra.mxu0 %v907
          %929 = vmatpush.msra.mxu0 %v906
          %930 = vmatpush.msra.mxu0 %v905
          %931 = vmatpush.msra.mxu0 %v904
          %932 = vmatmul.f32.gmra.mxu0 %v914
          %v933 = vpop.f32.mrf.mxu0
          %v934 = vadd.f32 %v910, %v933
          %935 = vdwg.mxu0
          %v936 = vlaneseq
          %v937 = vshrl.u32 %v936, 7
          %v938 = vstv %s438
          %v939 = vadd.s32 %v938, %v937
          %v940 = vlaneseq
          %v941 = vand.u32 %v940, 127
          %v942 = vstv %s440
          %v943 = vadd.s32 %v942, %v941
          %vm944 = vcmp.le.s32.totalorder %v943, %v939
          %v945 = vld [vmem:[#allocation2] sm:$0xff]
          %vm946 = vcmask 64512
          %v948 = vsel %vm946, %v945, 0
          %v951 = vsel %vm946, %v934, 0
          %953 = vmatpush.xpose.msra.mxu0 0.0
          %954 = vmatpush.xpose.msra.mxu0 0.0
          %955 = vmatpush.xpose.msra.mxu0 0.0
          %956 = vmatpush.xpose.msra.mxu0 0.0
          %957 = vmatpush.xpose.msra.mxu0 0.0
          %958 = vmatpush.xpose.msra.mxu0 0.0
          %959 = vmatpush.xpose.msra.mxu0 0.0
          %960 = vmatpush.xpose.msra.mxu0 0.0
          %961 = vmatpush.xpose.msra.mxu0 0.0
          %962 = vmatpush.xpose.msra.mxu0 0.0
          %963 = vmatpush.xpose.msra.mxu0 0.0
          %964 = vmatpush.xpose.msra.mxu0 0.0
          %965 = vmatpush.xpose.msra.mxu0 0.0
          %966 = vmatpush.xpose.msra.mxu0 0.0
          %967 = vmatpush.xpose.msra.mxu0 0.0
          %968 = vmatpush.xpose.msra.mxu0 %v951
          %969 = vmatmul.f32.gmra.mxu0 %v948
          %v970 = vpop.f32.mrf.mxu0
          %v971 = vadd.f32 0.0, %v970
          %972 = vdwg.mxu0
          %v973 = vsel %vm944, %v971, -inf
          %v974 = vld [vmem:[#allocation3] sm:$0xff]
          %v975 = vsel %vm946, %v973, -inf
          %976 = vmax.xlane.f32.xlu0 %v975
          %v977 = vpop.xlane.xlu0 %976
          %v978 = vmax.f32 %v974, %v977
          %v979 = vsub.f32 %v974, %v978
          %v980 = vmul.f32 %v979, 1.442695
          %v981 = vpow.pop %v980
          %983 = vset.pattern.permute.xlu0 0
          %984 = vperm.xlu0 %983, %v978
          %v985 = vpop.permute.xlu0 %984
          %v987 = vsub.f32 %v973, %v985
          %v988 = vmul.f32 %v987, 1.442695
          %v989 = vpow.pop %v988
          %v990 = vld [vmem:[#allocation4] sm:$0xff]
          %v991 = vmul.f32 %v981, %v990
          %v992 = vsel %vm946, %v989, 0.0
          %993 = vadd.xlane.f32.xlu0 %v992
          %v994 = vpop.xlane.xlu0 %993
          %v995 = vadd.f32 %v991, %v994
          %vm996 = vcmask 7168
          %997 = vst.msk [vmem:[#allocation4] sm:$0xff] %vm996, %v995
          %v998 = vld [vmem:[#allocation5] sm:$0xff]
          %1000 = vset.pattern.permute.xlu0 0
          %1001 = vperm.xlu0 %1000, %v981
          %v1002 = vpop.permute.xlu0 %1001
          %v1004 = vmul.f32 %v1002, %v998
          %1005 = vrot.lane.b32.xlu0 %v934, 96
          %v1006 = vpop.permute.xlu0 %1005
          %v1009 = vsel %vm946, %v989, 0
          %1011 = vmatpush.msra.mxu0 0.0
          %1012 = vmatpush.msra.mxu0 0.0
          %1013 = vmatpush.msra.mxu0 0.0
          %1014 = vmatpush.msra.mxu0 0.0
          %1015 = vmatpush.msra.mxu0 0.0
          %1016 = vmatpush.msra.mxu0 0.0
          %1017 = vmatpush.msra.mxu0 0.0
          %1018 = vmatpush.msra.mxu0 0.0
          %1019 = vmatpush.msra.mxu0 0.0
          %1020 = vmatpush.msra.mxu0 0.0
          %1021 = vmatpush.msra.mxu0 0.0
          %1022 = vmatpush.msra.mxu0 0.0
          %1023 = vmatpush.msra.mxu0 0.0
          %1024 = vmatpush.msra.mxu0 0.0
          %1025 = vmatpush.msra.mxu0 0.0
          %1026 = vmatpush.msra.mxu0 %v1006
          %1027 = vmatmul.f32.gmra.mxu0 %v1009
          %v1028 = vpop.f32.mrf.mxu0
          %v1029 = vadd.f32 0.0, %v1028
          %1030 = vdwg.mxu0
          %v1031 = vadd.f32 %v1004, %v1029
          %1032 = vst.msk [vmem:[#allocation5] sm:$0xff] %vm946, %v1031
          %1033 = vst.msk [vmem:[#allocation3] sm:$0xff] %vm996, %v978
          %1034 = vrot.lane.b32.xlu0 %v945, 120
          %v1035 = vpop.permute.xlu0 %1034
          %1036 = vrot.lane.b32.xlu0 %v934, 120
          %v1037 = vpop.permute.xlu0 %1036
          %v1038 = vsel %vm946, %v1035, 0
          %v1040 = vsel %vm946, %v1037, 0
          %1042 = vmatpush.xpose.msra.mxu0 0.0
          %1043 = vmatpush.xpose.msra.mxu0 0.0
          %1044 = vmatpush.xpose.msra.mxu0 0.0
          %1045 = vmatpush.xpose.msra.mxu0 0.0
          %1046 = vmatpush.xpose.msra.mxu0 0.0
          %1047 = vmatpush.xpose.msra.mxu0 0.0
          %1048 = vmatpush.xpose.msra.mxu0 0.0
          %1049 = vmatpush.xpose.msra.mxu0 0.0
          %1050 = vmatpush.xpose.msra.mxu0 0.0
          %1051 = vmatpush.xpose.msra.mxu0 0.0
          %1052 = vmatpush.xpose.msra.mxu0 0.0
          %1053 = vmatpush.xpose.msra.mxu0 0.0
          %1054 = vmatpush.xpose.msra.mxu0 0.0
          %1055 = vmatpush.xpose.msra.mxu0 0.0
          %1056 = vmatpush.xpose.msra.mxu0 0.0
          %1057 = vmatpush.xpose.msra.mxu0 %v1040
          %1058 = vmatmul.f32.gmra.mxu0 %v1038
          %v1059 = vpop.f32.mrf.mxu0
          %v1060 = vadd.f32 0.0, %v1059
          %1061 = vdwg.mxu0
          %v1062 = vsel %vm944, %v1060, -inf
          %s1063 = scalar_lea.vmem [#allocation3], 8
          %v1064 = vld [vmem:[%s1063] sm:$0xff]
          %v1065 = vsel %vm946, %v1062, -inf
          %1066 = vmax.xlane.f32.xlu0 %v1065
          %v1067 = vpop.xlane.xlu0 %1066
          %v1068 = vmax.f32 %v1064, %v1067
          %v1069 = vsub.f32 %v1064, %v1068
          %v1070 = vmul.f32 %v1069, 1.442695
          %v1071 = vpow.pop %v1070
          %1073 = vset.pattern.permute.xlu0 0
          %1074 = vperm.xlu0 %1073, %v1068
          %v1075 = vpop.permute.xlu0 %1074
          %v1077 = vsub.f32 %v1062, %v1075
          %v1078 = vmul.f32 %v1077, 1.442695
          %v1079 = vpow.pop %v1078
          %s1080 = scalar_lea.vmem [#allocation4], 8
          %v1081 = vld [vmem:[%s1080] sm:$0xff]
          %v1082 = vmul.f32 %v1071, %v1081
          %v1083 = vsel %vm946, %v1079, 0.0
          %1084 = vadd.xlane.f32.xlu0 %v1083
          %v1085 = vpop.xlane.xlu0 %1084
          %v1086 = vadd.f32 %v1082, %v1085
          %1087 = vst.msk [vmem:[%s1080] sm:$0xff] %vm996, %v1086
          %v1088 = vld [vmem:[#allocation5] sm:$0xff]
          %1090 = vset.pattern.permute.xlu0 0
          %1091 = vperm.xlu0 %1090, %v1071
          %v1092 = vpop.permute.xlu0 %1091
          %v1094 = vmul.f32 %v1092, %v1088
          %1095 = vrot.lane.b32.xlu0 %v934, 88
          %v1096 = vpop.permute.xlu0 %1095
          %v1099 = vsel %vm946, %v1079, 0
          %1101 = vmatpush.msra.mxu0 0.0
          %1102 = vmatpush.msra.mxu0 0.0
          %1103 = vmatpush.msra.mxu0 0.0
          %1104 = vmatpush.msra.mxu0 0.0
          %1105 = vmatpush.msra.mxu0 0.0
          %1106 = vmatpush.msra.mxu0 0.0
          %1107 = vmatpush.msra.mxu0 0.0
          %1108 = vmatpush.msra.mxu0 0.0
          %1109 = vmatpush.msra.mxu0 0.0
          %1110 = vmatpush.msra.mxu0 0.0
          %1111 = vmatpush.msra.mxu0 0.0
          %1112 = vmatpush.msra.mxu0 0.0
          %1113 = vmatpush.msra.mxu0 0.0
          %1114 = vmatpush.msra.mxu0 0.0
          %1115 = vmatpush.msra.mxu0 0.0
          %1116 = vmatpush.msra.mxu0 %v1096
          %1117 = vmatmul.f32.gmra.mxu0 %v1099
          %v1118 = vpop.f32.mrf.mxu0
          %v1119 = vadd.f32 0.0, %v1118
          %1120 = vdwg.mxu0
          %1122 = vrot.lane.b32.xlu0 %v1119, 8
          %v1123 = vpop.permute.xlu0 %1122
          %v1125 = vadd.f32 %v1094, %v1123
          %vm1126 = vcmask 130112
          %1127 = vst.msk [vmem:[#allocation5] sm:$0xff] %vm1126, %v1125
          %1128 = vst.msk [vmem:[%s1063] sm:$0xff] %vm996, %v1068
          %1129 = vrot.lane.b32.xlu0 %v945, 112
          %v1130 = vpop.permute.xlu0 %1129
          %1131 = vrot.lane.b32.xlu0 %v934, 112
          %v1132 = vpop.permute.xlu0 %1131
          %v1133 = vsel %vm946, %v1130, 0
          %v1135 = vsel %vm946, %v1132, 0
          %1137 = vmatpush.xpose.msra.mxu0 0.0
          %1138 = vmatpush.xpose.msra.mxu0 0.0
          %1139 = vmatpush.xpose.msra.mxu0 0.0
          %1140 = vmatpush.xpose.msra.mxu0 0.0
          %1141 = vmatpush.xpose.msra.mxu0 0.0
          %1142 = vmatpush.xpose.msra.mxu0 0.0
          %1143 = vmatpush.xpose.msra.mxu0 0.0
          %1144 = vmatpush.xpose.msra.mxu0 0.0
          %1145 = vmatpush.xpose.msra.mxu0 0.0
          %1146 = vmatpush.xpose.msra.mxu0 0.0
          %1147 = vmatpush.xpose.msra.mxu0 0.0
          %1148 = vmatpush.xpose.msra.mxu0 0.0
          %1149 = vmatpush.xpose.msra.mxu0 0.0
          %1150 = vmatpush.xpose.msra.mxu0 0.0
          %1151 = vmatpush.xpose.msra.mxu0 0.0
          %1152 = vmatpush.xpose.msra.mxu0 %v1135
          %1153 = vmatmul.f32.gmra.mxu0 %v1133
          %v1154 = vpop.f32.mrf.mxu0
          %v1155 = vadd.f32 0.0, %v1154
          %1156 = vdwg.mxu0
          %v1157 = vsel %vm944, %v1155, -inf
          %s1158 = scalar_lea.vmem [#allocation3], 16
          %v1159 = vld [vmem:[%s1158] sm:$0xff]
          %v1160 = vsel %vm946, %v1157, -inf
          %1161 = vmax.xlane.f32.xlu0 %v1160
          %v1162 = vpop.xlane.xlu0 %1161
          %v1163 = vmax.f32 %v1159, %v1162
          %v1164 = vsub.f32 %v1159, %v1163
          %v1165 = vmul.f32 %v1164, 1.442695
          %v1166 = vpow.pop %v1165
          %1168 = vset.pattern.permute.xlu0 0
          %1169 = vperm.xlu0 %1168, %v1163
          %v1170 = vpop.permute.xlu0 %1169
          %v1172 = vsub.f32 %v1157, %v1170
          %v1173 = vmul.f32 %v1172, 1.442695
          %v1174 = vpow.pop %v1173
          %s1175 = scalar_lea.vmem [#allocation4], 16
          %v1176 = vld [vmem:[%s1175] sm:$0xff]
          %v1177 = vmul.f32 %v1166, %v1176
          %v1178 = vsel %vm946, %v1174, 0.0
          %1179 = vadd.xlane.f32.xlu0 %v1178
          %v1180 = vpop.xlane.xlu0 %1179
          %v1181 = vadd.f32 %v1177, %v1180
          %1182 = vst.msk [vmem:[%s1175] sm:$0xff] %vm996, %v1181
          %v1183 = vld [vmem:[#allocation5] sm:$0xff]
          %1185 = vset.pattern.permute.xlu0 0
          %1186 = vperm.xlu0 %1185, %v1166
          %v1187 = vpop.permute.xlu0 %1186
          %v1189 = vmul.f32 %v1187, %v1183
          %1190 = vrot.lane.b32.xlu0 %v934, 80
          %v1191 = vpop.permute.xlu0 %1190
          %v1194 = vsel %vm946, %v1174, 0
          %1196 = vmatpush.msra.mxu0 0.0
          %1197 = vmatpush.msra.mxu0 0.0
          %1198 = vmatpush.msra.mxu0 0.0
          %1199 = vmatpush.msra.mxu0 0.0
          %1200 = vmatpush.msra.mxu0 0.0
          %1201 = vmatpush.msra.mxu0 0.0
          %1202 = vmatpush.msra.mxu0 0.0
          %1203 = vmatpush.msra.mxu0 0.0
          %1204 = vmatpush.msra.mxu0 0.0
          %1205 = vmatpush.msra.mxu0 0.0
          %1206 = vmatpush.msra.mxu0 0.0
          %1207 = vmatpush.msra.mxu0 0.0
          %1208 = vmatpush.msra.mxu0 0.0
          %1209 = vmatpush.msra.mxu0 0.0
          %1210 = vmatpush.msra.mxu0 0.0
          %1211 = vmatpush.msra.mxu0 %v1191
          %1212 = vmatmul.f32.gmra.mxu0 %v1194
          %v1213 = vpop.f32.mrf.mxu0
          %v1214 = vadd.f32 0.0, %v1213
          %1215 = vdwg.mxu0
          %1217 = vrot.lane.b32.xlu0 %v1214, 16
          %v1218 = vpop.permute.xlu0 %1217
          %v1220 = vadd.f32 %v1189, %v1218
          %vm1221 = vcmask 195712
          %1222 = vst.msk [vmem:[#allocation5] sm:$0xff] %vm1221, %v1220
          %1223 = vst.msk [vmem:[%s1158] sm:$0xff] %vm996, %v1163
          %1224 = vrot.lane.b32.xlu0 %v945, 104
          %v1225 = vpop.permute.xlu0 %1224
          %1226 = vrot.lane.b32.xlu0 %v934, 104
          %v1227 = vpop.permute.xlu0 %1226
          %v1228 = vsel %vm946, %v1225, 0
          %v1230 = vsel %vm946, %v1227, 0
          %1232 = vmatpush.xpose.msra.mxu0 0.0
          %1233 = vmatpush.xpose.msra.mxu0 0.0
          %1234 = vmatpush.xpose.msra.mxu0 0.0
          %1235 = vmatpush.xpose.msra.mxu0 0.0
          %1236 = vmatpush.xpose.msra.mxu0 0.0
          %1237 = vmatpush.xpose.msra.mxu0 0.0
          %1238 = vmatpush.xpose.msra.mxu0 0.0
          %1239 = vmatpush.xpose.msra.mxu0 0.0
          %1240 = vmatpush.xpose.msra.mxu0 0.0
          %1241 = vmatpush.xpose.msra.mxu0 0.0
          %1242 = vmatpush.xpose.msra.mxu0 0.0
          %1243 = vmatpush.xpose.msra.mxu0 0.0
          %1244 = vmatpush.xpose.msra.mxu0 0.0
          %1245 = vmatpush.xpose.msra.mxu0 0.0
          %1246 = vmatpush.xpose.msra.mxu0 0.0
          %1247 = vmatpush.xpose.msra.mxu0 %v1230
          %1248 = vmatmul.f32.gmra.mxu0 %v1228
          %v1249 = vpop.f32.mrf.mxu0
          %v1250 = vadd.f32 0.0, %v1249
          %1251 = vdwg.mxu0
          %v1252 = vsel %vm944, %v1250, -inf
          %s1253 = scalar_lea.vmem [#allocation3], 24
          %v1254 = vld [vmem:[%s1253] sm:$0xff]
          %v1255 = vsel %vm946, %v1252, -inf
          %1256 = vmax.xlane.f32.xlu0 %v1255
          %v1257 = vpop.xlane.xlu0 %1256
          %v1258 = vmax.f32 %v1254, %v1257
          %v1259 = vsub.f32 %v1254, %v1258
          %v1260 = vmul.f32 %v1259, 1.442695
          %v1261 = vpow.pop %v1260
          %1263 = vset.pattern.permute.xlu0 0
          %1264 = vperm.xlu0 %1263, %v1258
          %v1265 = vpop.permute.xlu0 %1264
          %v1267 = vsub.f32 %v1252, %v1265
          %v1268 = vmul.f32 %v1267, 1.442695
          %v1269 = vpow.pop %v1268
          %s1270 = scalar_lea.vmem [#allocation4], 24
          %v1271 = vld [vmem:[%s1270] sm:$0xff]
          %v1272 = vmul.f32 %v1261, %v1271
          %v1273 = vsel %vm946, %v1269, 0.0
          %1274 = vadd.xlane.f32.xlu0 %v1273
          %v1275 = vpop.xlane.xlu0 %1274
          %v1276 = vadd.f32 %v1272, %v1275
          %1277 = vst.msk [vmem:[%s1270] sm:$0xff] %vm996, %v1276
          %v1278 = vld [vmem:[#allocation5] sm:$0xff]
          %1280 = vset.pattern.permute.xlu0 0
          %1281 = vperm.xlu0 %1280, %v1261
          %v1282 = vpop.permute.xlu0 %1281
          %v1284 = vmul.f32 %v1282, %v1278
          %1285 = vrot.lane.b32.xlu0 %v934, 72
          %v1286 = vpop.permute.xlu0 %1285
          %v1289 = vsel %vm946, %v1269, 0
          %1291 = vmatpush.msra.mxu0 0.0
          %1292 = vmatpush.msra.mxu0 0.0
          %1293 = vmatpush.msra.mxu0 0.0
          %1294 = vmatpush.msra.mxu0 0.0
          %1295 = vmatpush.msra.mxu0 0.0
          %1296 = vmatpush.msra.mxu0 0.0
          %1297 = vmatpush.msra.mxu0 0.0
          %1298 = vmatpush.msra.mxu0 0.0
          %1299 = vmatpush.msra.mxu0 0.0
          %1300 = vmatpush.msra.mxu0 0.0
          %1301 = vmatpush.msra.mxu0 0.0
          %1302 = vmatpush.msra.mxu0 0.0
          %1303 = vmatpush.msra.mxu0 0.0
          %1304 = vmatpush.msra.mxu0 0.0
          %1305 = vmatpush.msra.mxu0 0.0
          %1306 = vmatpush.msra.mxu0 %v1286
          %1307 = vmatmul.f32.gmra.mxu0 %v1289
          %v1308 = vpop.f32.mrf.mxu0
          %v1309 = vadd.f32 0.0, %v1308
          %1310 = vdwg.mxu0
          %1312 = vrot.lane.b32.xlu0 %v1309, 24
          %v1313 = vpop.permute.xlu0 %1312
          %v1315 = vadd.f32 %v1284, %v1313
          %vm1316 = vcmask 261312
          %1317 = vst.msk [vmem:[#allocation5] sm:$0xff] %vm1316, %v1315
          %1318 = vst.msk [vmem:[%s1253] sm:$0xff] %vm996, %v1258
        $region84: #{tpu_custom_call.1} parent=51 // pred_fallthru
          _
        // Predicated region
        $region85: #{tpu_custom_call.1} parent=51 // pred_check
          %p1319 = pneg %p442
        $region86: #{tpu_custom_call.1} parent=51 // pred_check_branch
          %1321 = sbr.rel (%p1319) target = $region88
        $region87: #{tpu_custom_call.1} parent=51 // pred_region
          %v1322 = vld [vmem:[#allocation4] sm:$0xff]
          %v1323 = vrcp.pop %v1322
          %v1324 = vld [vmem:[#allocation5] sm:$0xff]
          %1326 = vset.pattern.permute.xlu0 0
          %1327 = vperm.xlu0 %1326, %v1323
          %v1328 = vpop.permute.xlu0 %1327
          %v1330 = vmul.f32 %v1324, %v1328
          %vm1331 = vcmask 64512
          %1332 = vst.msk [vmem:[#allocation5] sm:$0xff] %vm1331, %v1330
          %s1333 = scalar_lea.vmem [#allocation4], 8
          %v1334 = vld [vmem:[%s1333] sm:$0xff]
          %v1335 = vrcp.pop %v1334
          %v1336 = vld [vmem:[#allocation5] sm:$0xff]
          %1338 = vset.pattern.permute.xlu0 0
          %1339 = vperm.xlu0 %1338, %v1335
          %v1340 = vpop.permute.xlu0 %1339
          %v1342 = vmul.f32 %v1336, %v1340
          %vm1343 = vcmask 130112
          %1344 = vst.msk [vmem:[#allocation5] sm:$0xff] %vm1343, %v1342
          %s1345 = scalar_lea.vmem [#allocation4], 16
          %v1346 = vld [vmem:[%s1345] sm:$0xff]
          %v1347 = vrcp.pop %v1346
          %v1348 = vld [vmem:[#allocation5] sm:$0xff]
          %1350 = vset.pattern.permute.xlu0 0
          %1351 = vperm.xlu0 %1350, %v1347
          %v1352 = vpop.permute.xlu0 %1351
          %v1354 = vmul.f32 %v1348, %v1352
          %vm1355 = vcmask 195712
          %1356 = vst.msk [vmem:[#allocation5] sm:$0xff] %vm1355, %v1354
          %s1357 = scalar_lea.vmem [#allocation4], 24
          %v1358 = vld [vmem:[%s1357] sm:$0xff]
          %v1359 = vrcp.pop %v1358
          %v1360 = vld [vmem:[#allocation5] sm:$0xff]
          %1362 = vset.pattern.permute.xlu0 0
          %1363 = vperm.xlu0 %1362, %v1359
          %v1364 = vpop.permute.xlu0 %1363
          %v1366 = vmul.f32 %v1360, %v1364
          %vm1367 = vcmask 261312
          %1368 = vst.msk [vmem:[#allocation5] sm:$0xff] %vm1367, %v1366
          %v1369 = vld [vmem:[#allocation5] sm:$0xff]
          %v1370 = vld [vmem:[#allocation14] sm:$0xff]
          %v1371 = vld [vmem:[#allocation14 + $0x8] sm:$0xff]
          %v1372 = vld [vmem:[#allocation14 + $0x10] sm:$0xff]
          %v1373 = vld [vmem:[#allocation14 + $0x18] sm:$0xff]
          %v1374 = vld [vmem:[%s7] sm:$0x1]
          %v1376 = vperm.slane %v1374, 0
          %vm1378 = vcmask 261120
          %v1380 = vsel %vm1378, %v1369, 0
          %1382 = vmatpush.msra.mxu0 0.0
          %1383 = vmatpush.msra.mxu0 0.0
          %1384 = vmatpush.msra.mxu0 0.0
          %1385 = vmatpush.msra.mxu0 0.0
          %1386 = vmatpush.msra.mxu0 0.0
          %1387 = vmatpush.msra.mxu0 0.0
          %1388 = vmatpush.msra.mxu0 0.0
          %1389 = vmatpush.msra.mxu0 0.0
          %1390 = vmatpush.msra.mxu0 0.0
          %1391 = vmatpush.msra.mxu0 0.0
          %1392 = vmatpush.msra.mxu0 0.0
          %1393 = vmatpush.msra.mxu0 0.0
          %1394 = vmatpush.msra.mxu0 %v1373
          %1395 = vmatpush.msra.mxu0 %v1372
          %1396 = vmatpush.msra.mxu0 %v1371
          %1397 = vmatpush.msra.mxu0 %v1370
          %1398 = vmatmul.f32.gmra.mxu0 %v1380
          %v1399 = vpop.f32.mrf.mxu0
          %v1400 = vadd.f32 %v1376, %v1399
          %1401 = vdwg.mxu0
          %1402 = vst.msk [vmem:[%s437] sm:$0xff] %vm1378, %v1400
        $region88: #{tpu_custom_call.1} parent=51 // pred_fallthru
          _
        %s1403 = sand.u32 %s240, 1
        %s1404 = scalar_lea.sflag [#allocation8], %s1403
        %s1405 = sand.u32 %s240, 1
        %s1406 = smul.addr %s1405, 8
        %s1407 = scalar_lea.vmem [#allocation15], %s1406
        // Predicated region
        $region89: #{tpu_custom_call.1} parent=51 // pred_check
          %p1408 = pneg %p250
        $region90: #{tpu_custom_call.1} parent=51 // pred_check_branch
          %1410 = sbr.rel (%p1408) target = $region92
        $region91: #{tpu_custom_call.1} parent=51 // pred_region
          %1412 = vsyncadd %s1404, 0
          %s1413 = sadd.s32 %s35, %s34
          %s1414 = smul.addr %s1413, 8
          %s1415 = scalar_lea.hbm %s8, %s1414
          %s1417 = sshll.u32 %s1407, 4
          %s1418 = int_to_ptr.vmem [resolvable:$true] %s1417
          %s1419 = sshll.u32 %s1415, 4
          %s1420 = int_to_ptr.hbm [resolvable:$true] %s1419
          %1422 = dma.vmem_to_hbm [thread:$0]  %s1418, 128, %s1420, %s1404
        $region92: #{tpu_custom_call.1} parent=51 // pred_fallthru
          _
      $region52: #{tpu_custom_call.1} parent=5 // pred_fallthru
        _
      %p1423 = scmp.le.s32.totalorder 2, %s24
      // Predicated region
      $region93: #{tpu_custom_call.1} parent=5 // pred_check
        %p1424 = pneg %p1423
      $region94: #{tpu_custom_call.1} parent=5 // pred_check_branch
        %1426 = sbr.rel (%p1424) target = $region96
      $region95: #{tpu_custom_call.1} parent=5 // pred_region
        %s1427 = ssub.s32 %s24, 2
        // Predicated region
        $region97: #{tpu_custom_call.1} parent=95 // pred_check
          %p1428 = pneg %p256
        $region98: #{tpu_custom_call.1} parent=95 // pred_check_branch
          %1430 = sbr.rel (%p1428) target = $region100
        $region99: #{tpu_custom_call.1} parent=95 // pred_region
          %s1431 = sand.u32 %s241, 1
          %s1432 = scalar_lea.sflag [#allocation8], %s1431
          %s1433 = sand.u32 %s241, 1
          %s1434 = smul.addr %s1433, 8
          %s1435 = scalar_lea.vmem [#allocation15], %s1434
          %1437 = dma.done %s1432, 128
        $region100: #{tpu_custom_call.1} parent=95 // pred_fallthru
          _
      $region96: #{tpu_custom_call.1} parent=5 // pred_fallthru
        _
    $region6: #{tpu_custom_call.1} parent=1 // loop_footer
      %s28 = sadd.s32 1, %s24
    $region7: #{tpu_custom_call.1} parent=1 // loop_footer_branch
      %23 = sbr.rel target = $region3
    $region8: #{tpu_custom_call.1} parent=1 // loop_exit
      _
    %1438 = vsyncpa [#allocation7], 1
    %s1439 = scalar_lea.sflag [#allocation7], 1
    %1440 = vsyncpa %s1439, 1
    %1441 = vsyncpa [#allocation10], 1
    %s1442 = scalar_lea.sflag [#allocation10], 1
    %1443 = vsyncpa %s1442, 1
    %1444 = vsyncpa [#allocation13], 1
    %1445 = vsyncpa [#allocation8], 1
    %s1446 = scalar_lea.sflag [#allocation8], 1
    %1447 = vsyncpa %s1446, 1

</llo_original>
